<compile_context>
chip_gen: v7x
topology: tpu7x:2x2x1
jax: 0.10.0
libtpu: 0.0.40
codegen_flags: <defaults>
</compile_context>

<pallas_src>
import functools
import math

import jax
import jax.numpy as jnp
from jax.experimental import pallas as pl
from jax.experimental.pallas import tpu as pltpu


def _attention_kernel(x_ref, wqkv_ref, wproj_ref, b_ref, o_ref, *, B, N, C, num_heads):
    """Whole-batch attention in one invocation (no grid steps)."""
    hd = C // num_heads

    x = x_ref[...]                                                     # (B*N, C) bf16

    # One wide, lane-dense packed qkv projection for all batch rows and heads.
    # The softmax scale is pre-folded into the q columns of wqkv (wrapper).
    qkv = jnp.dot(x, wqkv_ref[...], preferred_element_type=jnp.float32)   # (B*N, 3C)
    # Split the sublane dim back into (B, N): N % 8 == 0 keeps the tile layout.
    qkv = qkv.astype(jnp.bfloat16).reshape(B, N, 3 * C)

    o_heads = []
    for h in range(num_heads):          # static unroll (H small): single basic block
        # Static lane slices (cheap XLU work vs. H tiny MXU matmuls).
        q = qkv[:, :, h * hd:(h + 1) * hd]                             # (B, N, hd)
        k = qkv[:, :, C + h * hd:C + (h + 1) * hd]                     # (B, N, hd)
        v = qkv[:, :, 2 * C + h * hd:2 * C + (h + 1) * hd]             # (B, N, hd)

        # Scores in f32 (scale already folded into q via the weights).
        s = jnp.einsum("bnd,bmd->bnm", q, k,
                       preferred_element_type=jnp.float32)             # (B, N, N)

        # Numerically-stable softmax statistics in f32; normalization deferred.
        s = s - jnp.max(s, axis=-1, keepdims=True)
        p = jnp.exp(s)
        l = jnp.sum(p, axis=-1, keepdims=True)                         # (B, N, 1)

        o_h = jnp.einsum("bnm,bmd->bnd", p.astype(jnp.bfloat16), v,
                         preferred_element_type=jnp.float32)           # (B, N, hd)
        # Deferred normalization: (N, hd) multiply instead of (N, N); EUP reciprocal.
        o_h = o_h * pl.reciprocal(l, approx=True)
        o_heads.append(o_h.astype(jnp.bfloat16))
        # attn_drop / proj_drop are p=0.0 in the module -> identity.

    # Stage all heads into one lane-dense (B*N, C) slab, then a single projection.
    o = jnp.concatenate(o_heads, axis=-1).reshape(B * N, C)            # bf16
    out = jnp.dot(o, wproj_ref[...], preferred_element_type=jnp.float32)
    o_ref[...] = out + b_ref[...]                                      # (B*N, C) f32


def attention_simple(x, wqkv_t, wproj_t, bproj, *, num_heads):
    """x: (B, N, C) f32.  wqkv_t: (C, 3C) so x @ wqkv_t is the packed qkv.
    wproj_t: (C, C) so o @ wproj_t + bproj is the output projection.
    Implements the module defaults: qkv_bias=False, attn_drop=proj_drop=0.0."""
    B, N, C = x.shape
    assert C % num_heads == 0
    hd = C // num_heads
    scale = hd ** (-0.5)

    # Fold the softmax scale into the q columns of the packed qkv weight (free).
    wqkv_s = wqkv_t.at[:, :C].multiply(scale).astype(jnp.bfloat16)     # (C, 3C)
    wproj_b = wproj_t.astype(jnp.bfloat16)                             # (C, C)
    b2d = bproj.reshape(1, C).astype(jnp.float32)

    # Fold batch rows into the matmul M dimension (free reshape outside the kernel).
    xb = x.reshape(B * N, C).astype(jnp.bfloat16)

    kernel = functools.partial(_attention_kernel, B=B, N=N, C=C, num_heads=num_heads)

    out = pl.pallas_call(
        kernel,
        out_shape=jax.ShapeDtypeStruct((B * N, C), jnp.float32),
        # Whole arrays resident in VMEM for a single grid-less invocation
        # (everything here is tiny; see TODO above for large-N tiling).
        in_specs=[
            pl.BlockSpec(memory_space=pltpu.MemorySpace.VMEM),         # x (B*N, C)
            pl.BlockSpec(memory_space=pltpu.MemorySpace.VMEM),         # Wqkv (C, 3C), q-scaled
            pl.BlockSpec(memory_space=pltpu.MemorySpace.VMEM),         # Wproj (C, C)
            pl.BlockSpec(memory_space=pltpu.MemorySpace.VMEM),         # proj bias (1, C)
        ],
        out_specs=pl.BlockSpec(memory_space=pltpu.MemorySpace.VMEM),
    )(xb, wqkv_s, wproj_b, b2d)

    return out.reshape(B, N, C)


def _reference(x, wqkv_t, wproj_t, bproj, *, num_heads):
    """Plain-JAX f32 reference mirroring the PyTorch forward."""
    B, N, C = x.shape
    hd = C // num_heads
    scale = hd ** (-0.5)
    qkv = x @ wqkv_t                                                   # (B, N, 3C)
    qkv = qkv.reshape(B, N, 3, num_heads, hd).transpose(2, 0, 3, 1, 4)
    q, k, v = qkv[0], qkv[1], qkv[2]                                   # (B, H, N, hd)
    attn = jnp.einsum("bhtd,bhsd->bhts", q, k) * scale
    attn = jax.nn.softmax(attn, axis=-1)
    o = jnp.einsum("bhts,bhsd->bhtd", attn, v)                         # (B, H, N, hd)
    o = o.transpose(0, 2, 1, 3).reshape(B, N, C)
    return o @ wproj_t + bproj


if __name__ == "__main__":
    # Small but TPU-friendly toy shapes: lane-dense C (=128), sublane-aligned N.
    B, N, C = 2, 16, 128
    num_heads = 8

    key = jax.random.PRNGKey(0)
    kx, kw1, kw2, kb = jax.random.split(key, 4)

    x = jax.random.normal(kx, (B, N, C), dtype=jnp.float32)

    # Deterministic parameter init (PyTorch nn.Linear-style uniform bounds).
    bound = 1.0 / math.sqrt(C)
    wqkv_t = jax.random.uniform(kw1, (C, 3 * C), jnp.float32, minval=-bound, maxval=bound)
    wproj_t = jax.random.uniform(kw2, (C, C), jnp.float32, minval=-bound, maxval=bound)
    bproj = jax.random.uniform(kb, (C,), jnp.float32, minval=-bound, maxval=bound)

    out = attention_simple(x, wqkv_t, wproj_t, bproj, num_heads=num_heads)
    out = jax.block_until_ready(out)

    ref = _reference(x, wqkv_t, wproj_t, bproj, num_heads=num_heads)
    assert out.shape == (B, N, C)
    max_err = float(jnp.max(jnp.abs(out - ref)))
    # bf16 MXU operands + approx reciprocal -> looser tolerance than pure f32.
    assert jnp.allclose(out, ref, atol=3e-2, rtol=3e-2), f"mismatch vs reference (max err {max_err})"

    print("KERNEL_OK")
</pallas_src>

<mosaic_0001>
module attributes {stable_mosaic.version = 11 : i64} {
  func.func @_attention_kernel(%arg0: memref<32x128xbf16, #tpu.memory_space<vmem>>, %arg1: memref<128x384xbf16, #tpu.memory_space<vmem>>, %arg2: memref<128x128xbf16, #tpu.memory_space<vmem>>, %arg3: memref<1x128xf32, #tpu.memory_space<vmem>>, %arg4: memref<32x128xf32, #tpu.memory_space<vmem>>) attributes {dimension_semantics = [], scalar_prefetch = 0 : i64, scratch_operands = 0 : i64, tpu.core_type = #tpu.core_type<tc>} {
    %c0 = arith.constant 0 : index
    %c0_0 = arith.constant 0 : index
    %0 = vector.load %arg0[%c0, %c0_0] : memref<32x128xbf16, #tpu.memory_space<vmem>>, vector<32x128xbf16>
    %c0_1 = arith.constant 0 : index
    %c0_2 = arith.constant 0 : index
    %1 = vector.load %arg1[%c0_1, %c0_2] : memref<128x384xbf16, #tpu.memory_space<vmem>>, vector<128x384xbf16>
    %cst = arith.constant dense<0.000000e+00> : vector<32x384xf32>
    %2 = tpu.matmul %0, %1, %cst {dimension_numbers = #tpu.dot_dimension_numbers<[1], [0], [0], [1], [0, 0, 1, 1], [], []>} : vector<32x128xbf16>, vector<128x384xbf16>, vector<32x384xf32> -> vector<32x384xf32>
    %3 = arith.truncf %2 : vector<32x384xf32> to vector<32x384xbf16>
    %4 = vector.shape_cast %3 : vector<32x384xbf16> to vector<2x16x384xbf16>
    %5 = vector.extract_strided_slice %4 {offsets = [0, 0, 0], sizes = [2, 16, 16], strides = [1, 1, 1]} : vector<2x16x384xbf16> to vector<2x16x16xbf16>
    %6 = vector.extract_strided_slice %4 {offsets = [0, 0, 128], sizes = [2, 16, 16], strides = [1, 1, 1]} : vector<2x16x384xbf16> to vector<2x16x16xbf16>
    %7 = vector.extract_strided_slice %4 {offsets = [0, 0, 256], sizes = [2, 16, 16], strides = [1, 1, 1]} : vector<2x16x384xbf16> to vector<2x16x16xbf16>
    "tpu.trace_start"() <{level = 10 : i32, message = "bnd,bmd->bnm"}> : () -> ()
    %cst_3 = arith.constant dense<0.000000e+00> : vector<2x16x16xf32>
    %8 = tpu.matmul %5, %6, %cst_3 {dimension_numbers = #tpu.dot_dimension_numbers<[2], [2], [1], [1], [0, 0, 0, 1, 1, 1], [0], [0]>} : vector<2x16x16xbf16>, vector<2x16x16xbf16>, vector<2x16x16xf32> -> vector<2x16x16xf32>
    "tpu.trace_stop"() : () -> ()
    %cst_4 = arith.constant dense<0xFF800000> : vector<2x16xf32>
    %9 = vector.multi_reduction <maximumf>, %8, %cst_4 [2] : vector<2x16x16xf32> to vector<2x16xf32>
    %10 = vector.shape_cast %9 : vector<2x16xf32> to vector<2x16x1xf32>
    %11 = vector.broadcast %10 : vector<2x16x1xf32> to vector<2x16x16xf32>
    %12 = arith.subf %8, %11 : vector<2x16x16xf32>
    %13 = math.exp %12 : vector<2x16x16xf32>
    %cst_5 = arith.constant dense<0.000000e+00> : vector<2x16xf32>
    %14 = vector.multi_reduction <add>, %13, %cst_5 [2] : vector<2x16x16xf32> to vector<2x16xf32>
    %15 = vector.shape_cast %14 : vector<2x16xf32> to vector<2x16x1xf32>
    %16 = arith.truncf %13 : vector<2x16x16xf32> to vector<2x16x16xbf16>
    "tpu.trace_start"() <{level = 10 : i32, message = "bnm,bmd->bnd"}> : () -> ()
    %cst_6 = arith.constant dense<0.000000e+00> : vector<2x16x16xf32>
    %17 = tpu.matmul %16, %7, %cst_6 {dimension_numbers = #tpu.dot_dimension_numbers<[2], [1], [1], [2], [0, 0, 0, 1, 1, 2], [0], [0]>} : vector<2x16x16xbf16>, vector<2x16x16xbf16>, vector<2x16x16xf32> -> vector<2x16x16xf32>
    "tpu.trace_stop"() : () -> ()
    %18 = tpu.reciprocal %15 {approx = true} : vector<2x16x1xf32> -> vector<2x16x1xf32>
    %19 = vector.broadcast %18 : vector<2x16x1xf32> to vector<2x16x16xf32>
    %20 = arith.mulf %17, %19 : vector<2x16x16xf32>
    %21 = arith.truncf %20 : vector<2x16x16xf32> to vector<2x16x16xbf16>
    %22 = vector.extract_strided_slice %4 {offsets = [0, 0, 16], sizes = [2, 16, 16], strides = [1, 1, 1]} : vector<2x16x384xbf16> to vector<2x16x16xbf16>
    %23 = vector.extract_strided_slice %4 {offsets = [0, 0, 144], sizes = [2, 16, 16], strides = [1, 1, 1]} : vector<2x16x384xbf16> to vector<2x16x16xbf16>
    %24 = vector.extract_strided_slice %4 {offsets = [0, 0, 272], sizes = [2, 16, 16], strides = [1, 1, 1]} : vector<2x16x384xbf16> to vector<2x16x16xbf16>
    "tpu.trace_start"() <{level = 10 : i32, message = "bnd,bmd->bnm"}> : () -> ()
    %cst_7 = arith.constant dense<0.000000e+00> : vector<2x16x16xf32>
    %25 = tpu.matmul %22, %23, %cst_7 {dimension_numbers = #tpu.dot_dimension_numbers<[2], [2], [1], [1], [0, 0, 0, 1, 1, 1], [0], [0]>} : vector<2x16x16xbf16>, vector<2x16x16xbf16>, vector<2x16x16xf32> -> vector<2x16x16xf32>
    "tpu.trace_stop"() : () -> ()
    %cst_8 = arith.constant dense<0xFF800000> : vector<2x16xf32>
    %26 = vector.multi_reduction <maximumf>, %25, %cst_8 [2] : vector<2x16x16xf32> to vector<2x16xf32>
    %27 = vector.shape_cast %26 : vector<2x16xf32> to vector<2x16x1xf32>
    %28 = vector.broadcast %27 : vector<2x16x1xf32> to vector<2x16x16xf32>
    %29 = arith.subf %25, %28 : vector<2x16x16xf32>
    %30 = math.exp %29 : vector<2x16x16xf32>
    %cst_9 = arith.constant dense<0.000000e+00> : vector<2x16xf32>
    %31 = vector.multi_reduction <add>, %30, %cst_9 [2] : vector<2x16x16xf32> to vector<2x16xf32>
    %32 = vector.shape_cast %31 : vector<2x16xf32> to vector<2x16x1xf32>
    %33 = arith.truncf %30 : vector<2x16x16xf32> to vector<2x16x16xbf16>
    "tpu.trace_start"() <{level = 10 : i32, message = "bnm,bmd->bnd"}> : () -> ()
    %cst_10 = arith.constant dense<0.000000e+00> : vector<2x16x16xf32>
    %34 = tpu.matmul %33, %24, %cst_10 {dimension_numbers = #tpu.dot_dimension_numbers<[2], [1], [1], [2], [0, 0, 0, 1, 1, 2], [0], [0]>} : vector<2x16x16xbf16>, vector<2x16x16xbf16>, vector<2x16x16xf32> -> vector<2x16x16xf32>
    "tpu.trace_stop"() : () -> ()
    %35 = tpu.reciprocal %32 {approx = true} : vector<2x16x1xf32> -> vector<2x16x1xf32>
    %36 = vector.broadcast %35 : vector<2x16x1xf32> to vector<2x16x16xf32>
    %37 = arith.mulf %34, %36 : vector<2x16x16xf32>
    %38 = arith.truncf %37 : vector<2x16x16xf32> to vector<2x16x16xbf16>
    %39 = vector.extract_strided_slice %4 {offsets = [0, 0, 32], sizes = [2, 16, 16], strides = [1, 1, 1]} : vector<2x16x384xbf16> to vector<2x16x16xbf16>
    %40 = vector.extract_strided_slice %4 {offsets = [0, 0, 160], sizes = [2, 16, 16], strides = [1, 1, 1]} : vector<2x16x384xbf16> to vector<2x16x16xbf16>
    %41 = vector.extract_strided_slice %4 {offsets = [0, 0, 288], sizes = [2, 16, 16], strides = [1, 1, 1]} : vector<2x16x384xbf16> to vector<2x16x16xbf16>
    "tpu.trace_start"() <{level = 10 : i32, message = "bnd,bmd->bnm"}> : () -> ()
    %cst_11 = arith.constant dense<0.000000e+00> : vector<2x16x16xf32>
    %42 = tpu.matmul %39, %40, %cst_11 {dimension_numbers = #tpu.dot_dimension_numbers<[2], [2], [1], [1], [0, 0, 0, 1, 1, 1], [0], [0]>} : vector<2x16x16xbf16>, vector<2x16x16xbf16>, vector<2x16x16xf32> -> vector<2x16x16xf32>
    "tpu.trace_stop"() : () -> ()
    %cst_12 = arith.constant dense<0xFF800000> : vector<2x16xf32>
    %43 = vector.multi_reduction <maximumf>, %42, %cst_12 [2] : vector<2x16x16xf32> to vector<2x16xf32>
    %44 = vector.shape_cast %43 : vector<2x16xf32> to vector<2x16x1xf32>
    %45 = vector.broadcast %44 : vector<2x16x1xf32> to vector<2x16x16xf32>
    %46 = arith.subf %42, %45 : vector<2x16x16xf32>
    %47 = math.exp %46 : vector<2x16x16xf32>
    %cst_13 = arith.constant dense<0.000000e+00> : vector<2x16xf32>
    %48 = vector.multi_reduction <add>, %47, %cst_13 [2] : vector<2x16x16xf32> to vector<2x16xf32>
    %49 = vector.shape_cast %48 : vector<2x16xf32> to vector<2x16x1xf32>
    %50 = arith.truncf %47 : vector<2x16x16xf32> to vector<2x16x16xbf16>
    "tpu.trace_start"() <{level = 10 : i32, message = "bnm,bmd->bnd"}> : () -> ()
    %cst_14 = arith.constant dense<0.000000e+00> : vector<2x16x16xf32>
    %51 = tpu.matmul %50, %41, %cst_14 {dimension_numbers = #tpu.dot_dimension_numbers<[2], [1], [1], [2], [0, 0, 0, 1, 1, 2], [0], [0]>} : vector<2x16x16xbf16>, vector<2x16x16xbf16>, vector<2x16x16xf32> -> vector<2x16x16xf32>
    "tpu.trace_stop"() : () -> ()
    %52 = tpu.reciprocal %49 {approx = true} : vector<2x16x1xf32> -> vector<2x16x1xf32>
    %53 = vector.broadcast %52 : vector<2x16x1xf32> to vector<2x16x16xf32>
    %54 = arith.mulf %51, %53 : vector<2x16x16xf32>
    %55 = arith.truncf %54 : vector<2x16x16xf32> to vector<2x16x16xbf16>
    %56 = vector.extract_strided_slice %4 {offsets = [0, 0, 48], sizes = [2, 16, 16], strides = [1, 1, 1]} : vector<2x16x384xbf16> to vector<2x16x16xbf16>
    %57 = vector.extract_strided_slice %4 {offsets = [0, 0, 176], sizes = [2, 16, 16], strides = [1, 1, 1]} : vector<2x16x384xbf16> to vector<2x16x16xbf16>
    %58 = vector.extract_strided_slice %4 {offsets = [0, 0, 304], sizes = [2, 16, 16], strides = [1, 1, 1]} : vector<2x16x384xbf16> to vector<2x16x16xbf16>
    "tpu.trace_start"() <{level = 10 : i32, message = "bnd,bmd->bnm"}> : () -> ()
    %cst_15 = arith.constant dense<0.000000e+00> : vector<2x16x16xf32>
    %59 = tpu.matmul %56, %57, %cst_15 {dimension_numbers = #tpu.dot_dimension_numbers<[2], [2], [1], [1], [0, 0, 0, 1, 1, 1], [0], [0]>} : vector<2x16x16xbf16>, vector<2x16x16xbf16>, vector<2x16x16xf32> -> vector<2x16x16xf32>
    "tpu.trace_stop"() : () -> ()
    %cst_16 = arith.constant dense<0xFF800000> : vector<2x16xf32>
    %60 = vector.multi_reduction <maximumf>, %59, %cst_16 [2] : vector<2x16x16xf32> to vector<2x16xf32>
    %61 = vector.shape_cast %60 : vector<2x16xf32> to vector<2x16x1xf32>
    %62 = vector.broadcast %61 : vector<2x16x1xf32> to vector<2x16x16xf32>
    %63 = arith.subf %59, %62 : vector<2x16x16xf32>
    %64 = math.exp %63 : vector<2x16x16xf32>
    %cst_17 = arith.constant dense<0.000000e+00> : vector<2x16xf32>
    %65 = vector.multi_reduction <add>, %64, %cst_17 [2] : vector<2x16x16xf32> to vector<2x16xf32>
    %66 = vector.shape_cast %65 : vector<2x16xf32> to vector<2x16x1xf32>
    %67 = arith.truncf %64 : vector<2x16x16xf32> to vector<2x16x16xbf16>
    "tpu.trace_start"() <{level = 10 : i32, message = "bnm,bmd->bnd"}> : () -> ()
    %cst_18 = arith.constant dense<0.000000e+00> : vector<2x16x16xf32>
    %68 = tpu.matmul %67, %58, %cst_18 {dimension_numbers = #tpu.dot_dimension_numbers<[2], [1], [1], [2], [0, 0, 0, 1, 1, 2], [0], [0]>} : vector<2x16x16xbf16>, vector<2x16x16xbf16>, vector<2x16x16xf32> -> vector<2x16x16xf32>
    "tpu.trace_stop"() : () -> ()
    %69 = tpu.reciprocal %66 {approx = true} : vector<2x16x1xf32> -> vector<2x16x1xf32>
    %70 = vector.broadcast %69 : vector<2x16x1xf32> to vector<2x16x16xf32>
    %71 = arith.mulf %68, %70 : vector<2x16x16xf32>
    %72 = arith.truncf %71 : vector<2x16x16xf32> to vector<2x16x16xbf16>
    %73 = vector.extract_strided_slice %4 {offsets = [0, 0, 64], sizes = [2, 16, 16], strides = [1, 1, 1]} : vector<2x16x384xbf16> to vector<2x16x16xbf16>
    %74 = vector.extract_strided_slice %4 {offsets = [0, 0, 192], sizes = [2, 16, 16], strides = [1, 1, 1]} : vector<2x16x384xbf16> to vector<2x16x16xbf16>
    %75 = vector.extract_strided_slice %4 {offsets = [0, 0, 320], sizes = [2, 16, 16], strides = [1, 1, 1]} : vector<2x16x384xbf16> to vector<2x16x16xbf16>
    "tpu.trace_start"() <{level = 10 : i32, message = "bnd,bmd->bnm"}> : () -> ()
    %cst_19 = arith.constant dense<0.000000e+00> : vector<2x16x16xf32>
    %76 = tpu.matmul %73, %74, %cst_19 {dimension_numbers = #tpu.dot_dimension_numbers<[2], [2], [1], [1], [0, 0, 0, 1, 1, 1], [0], [0]>} : vector<2x16x16xbf16>, vector<2x16x16xbf16>, vector<2x16x16xf32> -> vector<2x16x16xf32>
    "tpu.trace_stop"() : () -> ()
    %cst_20 = arith.constant dense<0xFF800000> : vector<2x16xf32>
    %77 = vector.multi_reduction <maximumf>, %76, %cst_20 [2] : vector<2x16x16xf32> to vector<2x16xf32>
    %78 = vector.shape_cast %77 : vector<2x16xf32> to vector<2x16x1xf32>
    %79 = vector.broadcast %78 : vector<2x16x1xf32> to vector<2x16x16xf32>
    %80 = arith.subf %76, %79 : vector<2x16x16xf32>
    %81 = math.exp %80 : vector<2x16x16xf32>
    %cst_21 = arith.constant dense<0.000000e+00> : vector<2x16xf32>
    %82 = vector.multi_reduction <add>, %81, %cst_21 [2] : vector<2x16x16xf32> to vector<2x16xf32>
    %83 = vector.shape_cast %82 : vector<2x16xf32> to vector<2x16x1xf32>
    %84 = arith.truncf %81 : vector<2x16x16xf32> to vector<2x16x16xbf16>
    "tpu.trace_start"() <{level = 10 : i32, message = "bnm,bmd->bnd"}> : () -> ()
    %cst_22 = arith.constant dense<0.000000e+00> : vector<2x16x16xf32>
    %85 = tpu.matmul %84, %75, %cst_22 {dimension_numbers = #tpu.dot_dimension_numbers<[2], [1], [1], [2], [0, 0, 0, 1, 1, 2], [0], [0]>} : vector<2x16x16xbf16>, vector<2x16x16xbf16>, vector<2x16x16xf32> -> vector<2x16x16xf32>
    "tpu.trace_stop"() : () -> ()
    %86 = tpu.reciprocal %83 {approx = true} : vector<2x16x1xf32> -> vector<2x16x1xf32>
    %87 = vector.broadcast %86 : vector<2x16x1xf32> to vector<2x16x16xf32>
    %88 = arith.mulf %85, %87 : vector<2x16x16xf32>
    %89 = arith.truncf %88 : vector<2x16x16xf32> to vector<2x16x16xbf16>
    %90 = vector.extract_strided_slice %4 {offsets = [0, 0, 80], sizes = [2, 16, 16], strides = [1, 1, 1]} : vector<2x16x384xbf16> to vector<2x16x16xbf16>
    %91 = vector.extract_strided_slice %4 {offsets = [0, 0, 208], sizes = [2, 16, 16], strides = [1, 1, 1]} : vector<2x16x384xbf16> to vector<2x16x16xbf16>
    %92 = vector.extract_strided_slice %4 {offsets = [0, 0, 336], sizes = [2, 16, 16], strides = [1, 1, 1]} : vector<2x16x384xbf16> to vector<2x16x16xbf16>
    "tpu.trace_start"() <{level = 10 : i32, message = "bnd,bmd->bnm"}> : () -> ()
    %cst_23 = arith.constant dense<0.000000e+00> : vector<2x16x16xf32>
    %93 = tpu.matmul %90, %91, %cst_23 {dimension_numbers = #tpu.dot_dimension_numbers<[2], [2], [1], [1], [0, 0, 0, 1, 1, 1], [0], [0]>} : vector<2x16x16xbf16>, vector<2x16x16xbf16>, vector<2x16x16xf32> -> vector<2x16x16xf32>
    "tpu.trace_stop"() : () -> ()
    %cst_24 = arith.constant dense<0xFF800000> : vector<2x16xf32>
    %94 = vector.multi_reduction <maximumf>, %93, %cst_24 [2] : vector<2x16x16xf32> to vector<2x16xf32>
    %95 = vector.shape_cast %94 : vector<2x16xf32> to vector<2x16x1xf32>
    %96 = vector.broadcast %95 : vector<2x16x1xf32> to vector<2x16x16xf32>
    %97 = arith.subf %93, %96 : vector<2x16x16xf32>
    %98 = math.exp %97 : vector<2x16x16xf32>
    %cst_25 = arith.constant dense<0.000000e+00> : vector<2x16xf32>
    %99 = vector.multi_reduction <add>, %98, %cst_25 [2] : vector<2x16x16xf32> to vector<2x16xf32>
    %100 = vector.shape_cast %99 : vector<2x16xf32> to vector<2x16x1xf32>
    %101 = arith.truncf %98 : vector<2x16x16xf32> to vector<2x16x16xbf16>
    "tpu.trace_start"() <{level = 10 : i32, message = "bnm,bmd->bnd"}> : () -> ()
    %cst_26 = arith.constant dense<0.000000e+00> : vector<2x16x16xf32>
    %102 = tpu.matmul %101, %92, %cst_26 {dimension_numbers = #tpu.dot_dimension_numbers<[2], [1], [1], [2], [0, 0, 0, 1, 1, 2], [0], [0]>} : vector<2x16x16xbf16>, vector<2x16x16xbf16>, vector<2x16x16xf32> -> vector<2x16x16xf32>
    "tpu.trace_stop"() : () -> ()
    %103 = tpu.reciprocal %100 {approx = true} : vector<2x16x1xf32> -> vector<2x16x1xf32>
    %104 = vector.broadcast %103 : vector<2x16x1xf32> to vector<2x16x16xf32>
    %105 = arith.mulf %102, %104 : vector<2x16x16xf32>
    %106 = arith.truncf %105 : vector<2x16x16xf32> to vector<2x16x16xbf16>
    %107 = vector.extract_strided_slice %4 {offsets = [0, 0, 96], sizes = [2, 16, 16], strides = [1, 1, 1]} : vector<2x16x384xbf16> to vector<2x16x16xbf16>
    %108 = vector.extract_strided_slice %4 {offsets = [0, 0, 224], sizes = [2, 16, 16], strides = [1, 1, 1]} : vector<2x16x384xbf16> to vector<2x16x16xbf16>
    %109 = vector.extract_strided_slice %4 {offsets = [0, 0, 352], sizes = [2, 16, 16], strides = [1, 1, 1]} : vector<2x16x384xbf16> to vector<2x16x16xbf16>
    "tpu.trace_start"() <{level = 10 : i32, message = "bnd,bmd->bnm"}> : () -> ()
    %cst_27 = arith.constant dense<0.000000e+00> : vector<2x16x16xf32>
    %110 = tpu.matmul %107, %108, %cst_27 {dimension_numbers = #tpu.dot_dimension_numbers<[2], [2], [1], [1], [0, 0, 0, 1, 1, 1], [0], [0]>} : vector<2x16x16xbf16>, vector<2x16x16xbf16>, vector<2x16x16xf32> -> vector<2x16x16xf32>
    "tpu.trace_stop"() : () -> ()
    %cst_28 = arith.constant dense<0xFF800000> : vector<2x16xf32>
    %111 = vector.multi_reduction <maximumf>, %110, %cst_28 [2] : vector<2x16x16xf32> to vector<2x16xf32>
    %112 = vector.shape_cast %111 : vector<2x16xf32> to vector<2x16x1xf32>
    %113 = vector.broadcast %112 : vector<2x16x1xf32> to vector<2x16x16xf32>
    %114 = arith.subf %110, %113 : vector<2x16x16xf32>
    %115 = math.exp %114 : vector<2x16x16xf32>
    %cst_29 = arith.constant dense<0.000000e+00> : vector<2x16xf32>
    %116 = vector.multi_reduction <add>, %115, %cst_29 [2] : vector<2x16x16xf32> to vector<2x16xf32>
    %117 = vector.shape_cast %116 : vector<2x16xf32> to vector<2x16x1xf32>
    %118 = arith.truncf %115 : vector<2x16x16xf32> to vector<2x16x16xbf16>
    "tpu.trace_start"() <{level = 10 : i32, message = "bnm,bmd->bnd"}> : () -> ()
    %cst_30 = arith.constant dense<0.000000e+00> : vector<2x16x16xf32>
    %119 = tpu.matmul %118, %109, %cst_30 {dimension_numbers = #tpu.dot_dimension_numbers<[2], [1], [1], [2], [0, 0, 0, 1, 1, 2], [0], [0]>} : vector<2x16x16xbf16>, vector<2x16x16xbf16>, vector<2x16x16xf32> -> vector<2x16x16xf32>
    "tpu.trace_stop"() : () -> ()
    %120 = tpu.reciprocal %117 {approx = true} : vector<2x16x1xf32> -> vector<2x16x1xf32>
    %121 = vector.broadcast %120 : vector<2x16x1xf32> to vector<2x16x16xf32>
    %122 = arith.mulf %119, %121 : vector<2x16x16xf32>
    %123 = arith.truncf %122 : vector<2x16x16xf32> to vector<2x16x16xbf16>
    %124 = vector.extract_strided_slice %4 {offsets = [0, 0, 112], sizes = [2, 16, 16], strides = [1, 1, 1]} : vector<2x16x384xbf16> to vector<2x16x16xbf16>
    %125 = vector.extract_strided_slice %4 {offsets = [0, 0, 240], sizes = [2, 16, 16], strides = [1, 1, 1]} : vector<2x16x384xbf16> to vector<2x16x16xbf16>
    %126 = vector.extract_strided_slice %4 {offsets = [0, 0, 368], sizes = [2, 16, 16], strides = [1, 1, 1]} : vector<2x16x384xbf16> to vector<2x16x16xbf16>
    "tpu.trace_start"() <{level = 10 : i32, message = "bnd,bmd->bnm"}> : () -> ()
    %cst_31 = arith.constant dense<0.000000e+00> : vector<2x16x16xf32>
    %127 = tpu.matmul %124, %125, %cst_31 {dimension_numbers = #tpu.dot_dimension_numbers<[2], [2], [1], [1], [0, 0, 0, 1, 1, 1], [0], [0]>} : vector<2x16x16xbf16>, vector<2x16x16xbf16>, vector<2x16x16xf32> -> vector<2x16x16xf32>
    "tpu.trace_stop"() : () -> ()
    %cst_32 = arith.constant dense<0xFF800000> : vector<2x16xf32>
    %128 = vector.multi_reduction <maximumf>, %127, %cst_32 [2] : vector<2x16x16xf32> to vector<2x16xf32>
    %129 = vector.shape_cast %128 : vector<2x16xf32> to vector<2x16x1xf32>
    %130 = vector.broadcast %129 : vector<2x16x1xf32> to vector<2x16x16xf32>
    %131 = arith.subf %127, %130 : vector<2x16x16xf32>
    %132 = math.exp %131 : vector<2x16x16xf32>
    %cst_33 = arith.constant dense<0.000000e+00> : vector<2x16xf32>
    %133 = vector.multi_reduction <add>, %132, %cst_33 [2] : vector<2x16x16xf32> to vector<2x16xf32>
    %134 = vector.shape_cast %133 : vector<2x16xf32> to vector<2x16x1xf32>
    %135 = arith.truncf %132 : vector<2x16x16xf32> to vector<2x16x16xbf16>
    "tpu.trace_start"() <{level = 10 : i32, message = "bnm,bmd->bnd"}> : () -> ()
    %cst_34 = arith.constant dense<0.000000e+00> : vector<2x16x16xf32>
    %136 = tpu.matmul %135, %126, %cst_34 {dimension_numbers = #tpu.dot_dimension_numbers<[2], [1], [1], [2], [0, 0, 0, 1, 1, 2], [0], [0]>} : vector<2x16x16xbf16>, vector<2x16x16xbf16>, vector<2x16x16xf32> -> vector<2x16x16xf32>
    "tpu.trace_stop"() : () -> ()
    %137 = tpu.reciprocal %134 {approx = true} : vector<2x16x1xf32> -> vector<2x16x1xf32>
    %138 = vector.broadcast %137 : vector<2x16x1xf32> to vector<2x16x16xf32>
    %139 = arith.mulf %136, %138 : vector<2x16x16xf32>
    %140 = arith.truncf %139 : vector<2x16x16xf32> to vector<2x16x16xbf16>
    %141 = tpu.concatenate %21, %38, %55, %72, %89, %106, %123, %140 in 2 : vector<2x16x16xbf16>, vector<2x16x16xbf16>, vector<2x16x16xbf16>, vector<2x16x16xbf16>, vector<2x16x16xbf16>, vector<2x16x16xbf16>, vector<2x16x16xbf16>, vector<2x16x16xbf16> -> vector<2x16x128xbf16>
    %142 = vector.shape_cast %141 : vector<2x16x128xbf16> to vector<32x128xbf16>
    %c0_35 = arith.constant 0 : index
    %c0_36 = arith.constant 0 : index
    %143 = vector.load %arg2[%c0_35, %c0_36] : memref<128x128xbf16, #tpu.memory_space<vmem>>, vector<128x128xbf16>
    %cst_37 = arith.constant dense<0.000000e+00> : vector<32x128xf32>
    %144 = tpu.matmul %142, %143, %cst_37 {dimension_numbers = #tpu.dot_dimension_numbers<[1], [0], [0], [1], [0, 0, 1, 1], [], []>} : vector<32x128xbf16>, vector<128x128xbf16>, vector<32x128xf32> -> vector<32x128xf32>
    %c0_38 = arith.constant 0 : index
    %c0_39 = arith.constant 0 : index
    %145 = vector.load %arg3[%c0_38, %c0_39] : memref<1x128xf32, #tpu.memory_space<vmem>>, vector<1x128xf32>
    %146 = vector.broadcast %145 : vector<1x128xf32> to vector<32x128xf32>
    %147 = arith.addf %144, %146 : vector<32x128xf32>
    %c0_40 = arith.constant 0 : index
    %c0_41 = arith.constant 0 : index
    %148 = vector.load %arg4[%c0_40, %c0_41] : memref<32x128xf32, #tpu.memory_space<vmem>>, vector<32x128xf32>
    tpu.vector_store %arg4[%c0_40, %c0_41], %147 {strides = array<i32>} : memref<32x128xf32, #tpu.memory_space<vmem>>, vector<32x128xf32>,
    return
  }
}

</mosaic_0001>

<llo_original>
// kernel: tpu_custom_call.1
$region0: #{tpu_custom_call.1}
  #allocation0 [shape = 'u32[]', space=smem, size = 0x4, offset = 0x4, fixed_abs, tag = 'smem constant byte address 0x4 - core index']
  #allocation1 [shape = 'u32[144,128]{1,0:T(1,128)}', space=vmem, size = 0x12000, scoped, tag = 'internal scratch']
  %s0 = inlined_call_operand.hbm [shape: bf16[32,128], index: 0, kind: input, shape index: {}]
  %s1 = inlined_call_operand.hbm [shape: bf16[128,384], index: 1, kind: input, shape index: {}]
  %s2 = inlined_call_operand.hbm [shape: bf16[128,128], index: 2, kind: input, shape index: {}]
  %s3 = inlined_call_operand.vmem [shape: f32[1,128], index: 3, kind: input, shape index: {}]
  %s4 = inlined_call_operand.hbm [shape: f32[32,128], index: 4, kind: output, shape index: {}]
  %s5 = sld [smem:[#allocation0]]
  $region38: #{tpu_custom_call.1} parent=0
    _
  %s7 = ssub.s32 1, %s5
  %s8 = scalar_select 0, %s7, %s5
  $region1: #{tpu_custom_call.1} parent=0
    #allocation2 [shape = 'u8[8192]{0}', space=vmem, size = 0x2000, scoped, tag = 'input window, operand 0, single buffered']
    #allocation3 [shape = 's32[1]{0}', space=sflag, size = 0x4, scoped, tag = 'scoped memory for tpu_custom_call.1']
    #allocation4 [shape = 's32[1]{0}', space=sflag, size = 0x4, scoped, tag = 'scoped memory for tpu_custom_call.1']
    #allocation5 [shape = 'u8[98304]{0}', space=vmem, size = 0x18000, scoped, tag = 'input window, operand 1, single buffered']
    #allocation6 [shape = 's32[1]{0}', space=sflag, size = 0x4, scoped, tag = 'scoped memory for tpu_custom_call.1']
    #allocation7 [shape = 'u8[32768]{0}', space=vmem, size = 0x8000, scoped, tag = 'input window, operand 2, single buffered']
    #allocation8 [shape = 'u8[16384]{0}', space=vmem, size = 0x4000, scoped, tag = 'output window, operand 0, single buffered']
    %9 = vsyncpa [#allocation3], 0
    %10 = vsyncpa [#allocation6], 0
    %11 = vsyncpa [#allocation4], 0
    // Predicated region
    $region2: #{tpu_custom_call.1} parent=1 // pred_check
      _
    $region3: #{tpu_custom_call.1} parent=1 // pred_check_branch
      %13 = sbr.rel (0) target = $region5
    $region4: #{tpu_custom_call.1} parent=1 // pred_region
      %s15 = ssub.s32 256, 256
      %16 = vsyncadd [#allocation3], %s15
      %s17 = sshll.u32 [#allocation2], 4
      %s18 = int_to_ptr.vmem [resolvable:$true] %s17
      %23 = dma.hbm_to_vmem [thread:$0]  %s0, 256, %s18, [#allocation3], 64, 64, 4
    $region5: #{tpu_custom_call.1} parent=1 // pred_fallthru
      _
    // Predicated region
    $region6: #{tpu_custom_call.1} parent=1 // pred_check
      _
    $region7: #{tpu_custom_call.1} parent=1 // pred_check_branch
      %25 = sbr.rel (0) target = $region9
    $region8: #{tpu_custom_call.1} parent=1 // pred_region
      %s27 = ssub.s32 3072, 3072
      %28 = vsyncadd [#allocation6], %s27
      %s29 = sshll.u32 [#allocation5], 4
      %s30 = int_to_ptr.vmem [resolvable:$true] %s29
      %35 = dma.hbm_to_vmem [thread:$0]  %s1, 3072, %s30, [#allocation6], 192, 192, 12
    $region9: #{tpu_custom_call.1} parent=1 // pred_fallthru
      _
    // Predicated region
    $region10: #{tpu_custom_call.1} parent=1 // pred_check
      _
    $region11: #{tpu_custom_call.1} parent=1 // pred_check_branch
      %37 = sbr.rel (0) target = $region13
    $region12: #{tpu_custom_call.1} parent=1 // pred_region
      %s39 = ssub.s32 1024, 1024
      %40 = vsyncadd [#allocation6], %s39
      %s41 = sshll.u32 [#allocation7], 4
      %s42 = int_to_ptr.vmem [resolvable:$true] %s41
      %47 = dma.hbm_to_vmem [thread:$0]  %s2, 1024, %s42, [#allocation6], 64, 64, 4
    $region13: #{tpu_custom_call.1} parent=1 // pred_fallthru
      _
    // Predicated region
    $region14: #{tpu_custom_call.1} parent=1 // pred_check
      _
    $region15: #{tpu_custom_call.1} parent=1 // pred_check_branch
      %49 = sbr.rel (0) target = $region17
    $region16: #{tpu_custom_call.1} parent=1 // pred_region
      _
    $region17: #{tpu_custom_call.1} parent=1 // pred_fallthru
      _
    // Predicated region
    $region18: #{tpu_custom_call.1} parent=1 // pred_check
      _
    $region19: #{tpu_custom_call.1} parent=1 // pred_check_branch
      %51 = sbr.rel (0) target = $region21
    $region20: #{tpu_custom_call.1} parent=1 // pred_region
      %52 = dma.done [#allocation3], 256
    $region21: #{tpu_custom_call.1} parent=1 // pred_fallthru
      _
    // Predicated region
    $region22: #{tpu_custom_call.1} parent=1 // pred_check
      _
    $region23: #{tpu_custom_call.1} parent=1 // pred_check_branch
      %54 = sbr.rel (0) target = $region25
    $region24: #{tpu_custom_call.1} parent=1 // pred_region
      %55 = dma.done [#allocation6], 3072
    $region25: #{tpu_custom_call.1} parent=1 // pred_fallthru
      _
    // Predicated region
    $region26: #{tpu_custom_call.1} parent=1 // pred_check
      _
    $region27: #{tpu_custom_call.1} parent=1 // pred_check_branch
      %57 = sbr.rel (0) target = $region29
    $region28: #{tpu_custom_call.1} parent=1 // pred_region
      %58 = dma.done [#allocation6], 1024
    $region29: #{tpu_custom_call.1} parent=1 // pred_fallthru
      _
    %v60 = vld [vmem:[#allocation2] sm:$0xf]
    %v61 = vld [vmem:[#allocation2 + $0x4] sm:$0xf]
    %v62 = vld [vmem:[#allocation2 + $0x8] sm:$0xf]
    %v63 = vld [vmem:[#allocation2 + $0xc] sm:$0xf]
    %v64 = vld [vmem:[#allocation5] sm:$0xff]
    %v65 = vld [vmem:[#allocation5 + $0x8] sm:$0xf]
    %v66 = vld [vmem:[#allocation5 + $0xc] sm:$0xff]
    %v67 = vld [vmem:[#allocation5 + $0x14] sm:$0xf]
    %v68 = vld [vmem:[#allocation5 + $0x18] sm:$0xff]
    %v69 = vld [vmem:[#allocation5 + $0x20] sm:$0xf]
    %v70 = vld [vmem:[#allocation5 + $0x24] sm:$0xff]
    %v71 = vld [vmem:[#allocation5 + $0x2c] sm:$0xf]
    %v72 = vld [vmem:[#allocation5 + $0x30] sm:$0xff]
    %v73 = vld [vmem:[#allocation5 + $0x38] sm:$0xf]
    %v74 = vld [vmem:[#allocation5 + $0x3c] sm:$0xff]
    %v75 = vld [vmem:[#allocation5 + $0x44] sm:$0xf]
    %v76 = vld [vmem:[#allocation5 + $0x48] sm:$0xff]
    %v77 = vld [vmem:[#allocation5 + $0x50] sm:$0xf]
    %v78 = vld [vmem:[#allocation5 + $0x54] sm:$0xff]
    %v79 = vld [vmem:[#allocation5 + $0x5c] sm:$0xf]
    %v80 = vld [vmem:[#allocation5 + $0x60] sm:$0xff]
    %v81 = vld [vmem:[#allocation5 + $0x68] sm:$0xf]
    %v82 = vld [vmem:[#allocation5 + $0x6c] sm:$0xff]
    %v83 = vld [vmem:[#allocation5 + $0x74] sm:$0xf]
    %v84 = vld [vmem:[#allocation5 + $0x78] sm:$0xff]
    %v85 = vld [vmem:[#allocation5 + $0x80] sm:$0xf]
    %v86 = vld [vmem:[#allocation5 + $0x84] sm:$0xff]
    %v87 = vld [vmem:[#allocation5 + $0x8c] sm:$0xf]
    %v88 = vld [vmem:[#allocation5 + $0x90] sm:$0xff]
    %v89 = vld [vmem:[#allocation5 + $0x98] sm:$0xf]
    %v90 = vld [vmem:[#allocation5 + $0x9c] sm:$0xff]
    %v91 = vld [vmem:[#allocation5 + $0xa4] sm:$0xf]
    %v92 = vld [vmem:[#allocation5 + $0xa8] sm:$0xff]
    %v93 = vld [vmem:[#allocation5 + $0xb0] sm:$0xf]
    %v94 = vld [vmem:[#allocation5 + $0xb4] sm:$0xff]
    %v95 = vld [vmem:[#allocation5 + $0xbc] sm:$0xf]
    %v100 = vunpack.c.l.b16 %v60
    %v101 = vunpack.c.l.b16 %v61
    %v102 = vunpack.c.l.b16 %v62
    %v103 = vunpack.c.l.b16 %v63
    %v104 = vpack.c.b16 %v101, %v100
    %v105 = vpack.c.b16 %v103, %v102
    %v140 = vunpack.c.l.b16 %v64
    %v141 = vunpack.c.h.b16 %v64
    %v142 = vunpack.c.l.b16 %v65
    %v143 = vunpack.c.l.b16 %v66
    %v144 = vunpack.c.h.b16 %v66
    %v145 = vunpack.c.l.b16 %v67
    %v146 = vunpack.c.l.b16 %v68
    %v147 = vunpack.c.h.b16 %v68
    %v148 = vunpack.c.l.b16 %v69
    %v149 = vunpack.c.l.b16 %v70
    %v150 = vunpack.c.h.b16 %v70
    %v151 = vunpack.c.l.b16 %v71
    %v152 = vunpack.c.l.b16 %v72
    %v153 = vunpack.c.h.b16 %v72
    %v154 = vunpack.c.l.b16 %v73
    %v155 = vunpack.c.l.b16 %v74
    %v156 = vunpack.c.h.b16 %v74
    %v157 = vunpack.c.l.b16 %v75
    %v158 = vunpack.c.l.b16 %v76
    %v159 = vunpack.c.h.b16 %v76
    %v160 = vunpack.c.l.b16 %v77
    %v161 = vunpack.c.l.b16 %v78
    %v162 = vunpack.c.h.b16 %v78
    %v163 = vunpack.c.l.b16 %v79
    %v164 = vunpack.c.l.b16 %v80
    %v165 = vunpack.c.h.b16 %v80
    %v166 = vunpack.c.l.b16 %v81
    %v167 = vunpack.c.l.b16 %v82
    %v168 = vunpack.c.h.b16 %v82
    %v169 = vunpack.c.l.b16 %v83
    %v170 = vunpack.c.l.b16 %v84
    %v171 = vunpack.c.h.b16 %v84
    %v172 = vunpack.c.l.b16 %v85
    %v173 = vunpack.c.l.b16 %v86
    %v174 = vunpack.c.h.b16 %v86
    %v175 = vunpack.c.l.b16 %v87
    %v176 = vunpack.c.l.b16 %v88
    %v177 = vunpack.c.h.b16 %v88
    %v178 = vunpack.c.l.b16 %v89
    %v179 = vunpack.c.l.b16 %v90
    %v180 = vunpack.c.h.b16 %v90
    %v181 = vunpack.c.l.b16 %v91
    %v182 = vunpack.c.l.b16 %v92
    %v183 = vunpack.c.h.b16 %v92
    %v184 = vunpack.c.l.b16 %v93
    %v185 = vunpack.c.l.b16 %v94
    %v186 = vunpack.c.h.b16 %v94
    %v187 = vunpack.c.l.b16 %v95
    %v188 = vpack.c.b16 %v143, %v140
    %v189 = vpack.c.b16 %v144, %v141
    %v190 = vpack.c.b16 %v145, %v142
    %v191 = vpack.c.b16 %v149, %v146
    %v192 = vpack.c.b16 %v150, %v147
    %v193 = vpack.c.b16 %v151, %v148
    %v194 = vpack.c.b16 %v155, %v152
    %v195 = vpack.c.b16 %v156, %v153
    %v196 = vpack.c.b16 %v157, %v154
    %v197 = vpack.c.b16 %v161, %v158
    %v198 = vpack.c.b16 %v162, %v159
    %v199 = vpack.c.b16 %v163, %v160
    %v200 = vpack.c.b16 %v167, %v164
    %v201 = vpack.c.b16 %v168, %v165
    %v202 = vpack.c.b16 %v169, %v166
    %v203 = vpack.c.b16 %v173, %v170
    %v204 = vpack.c.b16 %v174, %v171
    %v205 = vpack.c.b16 %v175, %v172
    %v206 = vpack.c.b16 %v179, %v176
    %v207 = vpack.c.b16 %v180, %v177
    %v208 = vpack.c.b16 %v181, %v178
    %v209 = vpack.c.b16 %v185, %v182
    %v210 = vpack.c.b16 %v186, %v183
    %v211 = vpack.c.b16 %v187, %v184
    %236 = vmatprep.subr.bf16.mxu0 %v189
    %237 = vmatpush1.bf16.msra.mxu0 %v188
    %238 = vmatprep.subr.bf16.mxu0 %v192
    %239 = vmatpush1.bf16.msra.mxu0 %v191
    %240 = vmatprep.subr.bf16.mxu0 %v195
    %241 = vmatpush1.bf16.msra.mxu0 %v194
    %242 = vmatprep.subr.bf16.mxu0 %v198
    %243 = vmatpush1.bf16.msra.mxu0 %v197
    %244 = vmatprep.subr.bf16.mxu0 %v201
    %245 = vmatpush1.bf16.msra.mxu0 %v200
    %246 = vmatprep.subr.bf16.mxu0 %v204
    %247 = vmatpush1.bf16.msra.mxu0 %v203
    %248 = vmatprep.subr.bf16.mxu0 %v207
    %249 = vmatpush1.bf16.msra.mxu0 %v206
    %250 = vmatprep.subr.bf16.mxu0 %v210
    %251 = vmatpush1.bf16.msra.mxu0 %v209
    %252 = vmatprep.subr.bf16.mxu0 0
    %253 = vmatpush1.bf16.msra.mxu0 0
    %254 = vmatprep.subr.bf16.mxu0 0
    %255 = vmatpush1.bf16.msra.mxu0 0
    %256 = vmatprep.subr.bf16.mxu0 0
    %257 = vmatpush1.bf16.msra.mxu0 0
    %258 = vmatprep.subr.bf16.mxu0 0
    %259 = vmatpush1.bf16.msra.mxu0 0
    %260 = vmatprep.subr.bf16.mxu0 0
    %261 = vmatpush1.bf16.msra.mxu0 0
    %262 = vmatprep.subr.bf16.mxu0 0
    %263 = vmatpush1.bf16.msra.mxu0 0
    %264 = vmatprep.subr.bf16.mxu0 0
    %265 = vmatpush1.bf16.msra.mxu0 0
    %266 = vmatprep.subr.bf16.mxu0 0
    %267 = vmatpush1.bf16.msra.mxu0 0
    %268 = vmatprep.mubr.bf16.mxu0 0
    %269 = vmatmul.mubr.bf16.gmra.mrb[0].mxu0 %v104
    %v270 = vpop.f32.mrb[0].mxu0
    %v271 = vadd.f32 0.0, %v270
    %v272 = vpop.f32.mrb[0].mxu0
    %v273 = vadd.f32 0.0, %v272
    %v274 = vpop.f32.mrb[0].mxu0
    %v275 = vadd.f32 0.0, %v274
    %v276 = vpop.f32.mrb[0].mxu0
    %v277 = vadd.f32 0.0, %v276
    %278 = vmatprep.mubr.bf16.mxu0 0
    %279 = vmatmul.mubr.bf16.gmra.mrb[0].mxu0 %v105
    %v280 = vpop.f32.mrb[0].mxu0
    %v281 = vadd.f32 0.0, %v280
    %v282 = vpop.f32.mrb[0].mxu0
    %v283 = vadd.f32 0.0, %v282
    %v284 = vpop.f32.mrb[0].mxu0
    %v285 = vadd.f32 0.0, %v284
    %v286 = vpop.f32.mrb[0].mxu0
    %v287 = vadd.f32 0.0, %v286
    %288 = vdwg.mxu0
    %289 = vmatprep.subr.bf16.mxu0 0
    %290 = vmatpush1.bf16.msra.mxu0 %v190
    %291 = vmatprep.subr.bf16.mxu0 0
    %292 = vmatpush1.bf16.msra.mxu0 %v193
    %293 = vmatprep.subr.bf16.mxu0 0
    %294 = vmatpush1.bf16.msra.mxu0 %v196
    %295 = vmatprep.subr.bf16.mxu0 0
    %296 = vmatpush1.bf16.msra.mxu0 %v199
    %297 = vmatprep.subr.bf16.mxu0 0
    %298 = vmatpush1.bf16.msra.mxu0 %v202
    %299 = vmatprep.subr.bf16.mxu0 0
    %300 = vmatpush1.bf16.msra.mxu0 %v205
    %301 = vmatprep.subr.bf16.mxu0 0
    %302 = vmatpush1.bf16.msra.mxu0 %v208
    %303 = vmatprep.subr.bf16.mxu0 0
    %304 = vmatpush1.bf16.msra.mxu0 %v211
    %305 = vmatprep.subr.bf16.mxu0 0
    %306 = vmatpush1.bf16.msra.mxu0 0
    %307 = vmatprep.subr.bf16.mxu0 0
    %308 = vmatpush1.bf16.msra.mxu0 0
    %309 = vmatprep.subr.bf16.mxu0 0
    %310 = vmatpush1.bf16.msra.mxu0 0
    %311 = vmatprep.subr.bf16.mxu0 0
    %312 = vmatpush1.bf16.msra.mxu0 0
    %313 = vmatprep.subr.bf16.mxu0 0
    %314 = vmatpush1.bf16.msra.mxu0 0
    %315 = vmatprep.subr.bf16.mxu0 0
    %316 = vmatpush1.bf16.msra.mxu0 0
    %317 = vmatprep.subr.bf16.mxu0 0
    %318 = vmatpush1.bf16.msra.mxu0 0
    %319 = vmatprep.subr.bf16.mxu0 0
    %320 = vmatpush1.bf16.msra.mxu0 0
    %321 = vmatprep.mubr.bf16.mxu0 0
    %322 = vmatmul.mubr.bf16.gmra.mrb[0].mxu0 %v104
    %v323 = vpop.f32.mrb[0].mxu0
    %v324 = vadd.f32 0.0, %v323
    %v325 = vpop.f32.mrb[0].mxu0
    %v326 = vpop.f32.mrb[0].mxu0
    %v327 = vadd.f32 0.0, %v326
    %v328 = vpop.f32.mrb[0].mxu0
    %329 = vmatprep.mubr.bf16.mxu0 0
    %330 = vmatmul.mubr.bf16.gmra.mrb[0].mxu0 %v105
    %v331 = vpop.f32.mrb[0].mxu0
    %v332 = vadd.f32 0.0, %v331
    %v333 = vpop.f32.mrb[0].mxu0
    %v334 = vpop.f32.mrb[0].mxu0
    %v335 = vadd.f32 0.0, %v334
    %v336 = vpop.f32.mrb[0].mxu0
    %337 = vdwg.mxu0
    %v338 = vpack.c.bf16 %v275, %v271
    %v339 = vpack.c.bf16 %v277, %v273
    %v340 = vpack.c.bf16 %v327, %v324
    %v341 = vpack.c.bf16 %v285, %v281
    %v342 = vpack.c.bf16 %v287, %v283
    %v343 = vpack.c.bf16 %v335, %v332
    %vm344 = vcmask 130048
    %v346 = vsel %vm344, %v338, 0
    %v349 = vsel %vm344, %v339, 0
    %351 = vmatprep.subr.bf16.mxu0 0
    %352 = vmatpush1.bf16.xpose.msra.mxu0 %v349
    %353 = vmatprep.subr.bf16.mxu0 0
    %354 = vmatpush1.bf16.xpose.msra.mxu0 0
    %355 = vmatprep.subr.bf16.mxu0 0
    %356 = vmatpush1.bf16.xpose.msra.mxu0 0
    %357 = vmatprep.subr.bf16.mxu0 0
    %358 = vmatpush1.bf16.xpose.msra.mxu0 0
    %359 = vmatprep.subr.bf16.mxu0 0
    %360 = vmatpush1.bf16.xpose.msra.mxu0 0
    %361 = vmatprep.subr.bf16.mxu0 0
    %362 = vmatpush1.bf16.xpose.msra.mxu0 0
    %363 = vmatprep.subr.bf16.mxu0 0
    %364 = vmatpush1.bf16.xpose.msra.mxu0 0
    %365 = vmatprep.subr.bf16.mxu0 0
    %366 = vmatpush1.bf16.xpose.msra.mxu0 0
    %367 = vmatprep.subr.bf16.mxu0 0
    %368 = vmatpush1.bf16.xpose.msra.mxu0 0
    %369 = vmatprep.subr.bf16.mxu0 0
    %370 = vmatpush1.bf16.xpose.msra.mxu0 0
    %371 = vmatprep.subr.bf16.mxu0 0
    %372 = vmatpush1.bf16.xpose.msra.mxu0 0
    %373 = vmatprep.subr.bf16.mxu0 0
    %374 = vmatpush1.bf16.xpose.msra.mxu0 0
    %375 = vmatprep.subr.bf16.mxu0 0
    %376 = vmatpush1.bf16.xpose.msra.mxu0 0
    %377 = vmatprep.subr.bf16.mxu0 0
    %378 = vmatpush1.bf16.xpose.msra.mxu0 0
    %379 = vmatprep.subr.bf16.mxu0 0
    %380 = vmatpush1.bf16.xpose.msra.mxu0 0
    %381 = vmatprep.subr.bf16.mxu0 0
    %382 = vmatpush1.bf16.xpose.msra.mxu0 0
    %383 = vmatprep.mubr.bf16.mxu0 0
    %384 = vmatmul.mubr.bf16.gmra.mrb[0].mxu0 %v346
    %v385 = vpop.f32.mrb[0].mxu0
    %v386 = vadd.f32 0.0, %v385
    %v387 = vpop.f32.mrb[0].mxu0
    %v388 = vpop.f32.mrb[0].mxu0
    %v389 = vadd.f32 0.0, %v388
    %v390 = vpop.f32.mrb[0].mxu0
    %391 = vdwg.mxu0
    %v393 = vsel %vm344, %v341, 0
    %v396 = vsel %vm344, %v342, 0
    %398 = vmatprep.subr.bf16.mxu0 0
    %399 = vmatpush1.bf16.xpose.msra.mxu0 %v396
    %400 = vmatprep.subr.bf16.mxu0 0
    %401 = vmatpush1.bf16.xpose.msra.mxu0 0
    %402 = vmatprep.subr.bf16.mxu0 0
    %403 = vmatpush1.bf16.xpose.msra.mxu0 0
    %404 = vmatprep.subr.bf16.mxu0 0
    %405 = vmatpush1.bf16.xpose.msra.mxu0 0
    %406 = vmatprep.subr.bf16.mxu0 0
    %407 = vmatpush1.bf16.xpose.msra.mxu0 0
    %408 = vmatprep.subr.bf16.mxu0 0
    %409 = vmatpush1.bf16.xpose.msra.mxu0 0
    %410 = vmatprep.subr.bf16.mxu0 0
    %411 = vmatpush1.bf16.xpose.msra.mxu0 0
    %412 = vmatprep.subr.bf16.mxu0 0
    %413 = vmatpush1.bf16.xpose.msra.mxu0 0
    %414 = vmatprep.subr.bf16.mxu0 0
    %415 = vmatpush1.bf16.xpose.msra.mxu0 0
    %416 = vmatprep.subr.bf16.mxu0 0
    %417 = vmatpush1.bf16.xpose.msra.mxu0 0
    %418 = vmatprep.subr.bf16.mxu0 0
    %419 = vmatpush1.bf16.xpose.msra.mxu0 0
    %420 = vmatprep.subr.bf16.mxu0 0
    %421 = vmatpush1.bf16.xpose.msra.mxu0 0
    %422 = vmatprep.subr.bf16.mxu0 0
    %423 = vmatpush1.bf16.xpose.msra.mxu0 0
    %424 = vmatprep.subr.bf16.mxu0 0
    %425 = vmatpush1.bf16.xpose.msra.mxu0 0
    %426 = vmatprep.subr.bf16.mxu0 0
    %427 = vmatpush1.bf16.xpose.msra.mxu0 0
    %428 = vmatprep.subr.bf16.mxu0 0
    %429 = vmatpush1.bf16.xpose.msra.mxu0 0
    %430 = vmatprep.mubr.bf16.mxu0 0
    %431 = vmatmul.mubr.bf16.gmra.mrb[0].mxu0 %v393
    %v432 = vpop.f32.mrb[0].mxu0
    %v433 = vadd.f32 0.0, %v432
    %v434 = vpop.f32.mrb[0].mxu0
    %v435 = vpop.f32.mrb[0].mxu0
    %v436 = vadd.f32 0.0, %v435
    %v437 = vpop.f32.mrb[0].mxu0
    %438 = vdwg.mxu0
    %v439 = vsel %vm344, %v386, -inf
    %440 = vmax.xlane.f32.xlu0 %v439
    %v441 = vpop.xlane.xlu0 %440
    %v442 = vsel %vm344, %v389, -inf
    %443 = vmax.xlane.f32.xlu0 %v442
    %v444 = vpop.xlane.xlu0 %443
    %v445 = vsel %vm344, %v433, -inf
    %446 = vmax.xlane.f32.xlu0 %v445
    %v447 = vpop.xlane.xlu0 %446
    %v448 = vsel %vm344, %v436, -inf
    %449 = vmax.xlane.f32.xlu0 %v448
    %v450 = vpop.xlane.xlu0 %449
    %v451 = vsub.f32 %v386, %v441
    %v452 = vsub.f32 %v389, %v444
    %v453 = vsub.f32 %v433, %v447
    %v454 = vsub.f32 %v436, %v450
    %v455 = vmul.f32 %v451, 1.442695
    %v456 = vpow.pop %v455
    %v457 = vmul.f32 %v452, 1.442695
    %v458 = vpow.pop %v457
    %v459 = vmul.f32 %v453, 1.442695
    %v460 = vpow.pop %v459
    %v461 = vmul.f32 %v454, 1.442695
    %v462 = vpow.pop %v461
    %v463 = vsel %vm344, %v456, 0.0
    %464 = vadd.xlane.f32.xlu0 %v463
    %v465 = vpop.xlane.xlu0 %464
    %v466 = vsel %vm344, %v458, 0.0
    %467 = vadd.xlane.f32.xlu0 %v466
    %v468 = vpop.xlane.xlu0 %467
    %v469 = vsel %vm344, %v460, 0.0
    %470 = vadd.xlane.f32.xlu0 %v469
    %v471 = vpop.xlane.xlu0 %470
    %v472 = vsel %vm344, %v462, 0.0
    %473 = vadd.xlane.f32.xlu0 %v472
    %v474 = vpop.xlane.xlu0 %473
    %v475 = vpack.c.bf16 %v458, %v456
    %v476 = vpack.c.bf16 %v462, %v460
    %v478 = vsel %vm344, %v475, 0
    %480 = vmatprep.subr.bf16.mxu0 0
    %481 = vmatpush1.bf16.msra.mxu0 %v340
    %482 = vmatprep.subr.bf16.mxu0 0
    %483 = vmatpush1.bf16.msra.mxu0 0
    %484 = vmatprep.subr.bf16.mxu0 0
    %485 = vmatpush1.bf16.msra.mxu0 0
    %486 = vmatprep.subr.bf16.mxu0 0
    %487 = vmatpush1.bf16.msra.mxu0 0
    %488 = vmatprep.subr.bf16.mxu0 0
    %489 = vmatpush1.bf16.msra.mxu0 0
    %490 = vmatprep.subr.bf16.mxu0 0
    %491 = vmatpush1.bf16.msra.mxu0 0
    %492 = vmatprep.subr.bf16.mxu0 0
    %493 = vmatpush1.bf16.msra.mxu0 0
    %494 = vmatprep.subr.bf16.mxu0 0
    %495 = vmatpush1.bf16.msra.mxu0 0
    %496 = vmatprep.subr.bf16.mxu0 0
    %497 = vmatpush1.bf16.msra.mxu0 0
    %498 = vmatprep.subr.bf16.mxu0 0
    %499 = vmatpush1.bf16.msra.mxu0 0
    %500 = vmatprep.subr.bf16.mxu0 0
    %501 = vmatpush1.bf16.msra.mxu0 0
    %502 = vmatprep.subr.bf16.mxu0 0
    %503 = vmatpush1.bf16.msra.mxu0 0
    %504 = vmatprep.subr.bf16.mxu0 0
    %505 = vmatpush1.bf16.msra.mxu0 0
    %506 = vmatprep.subr.bf16.mxu0 0
    %507 = vmatpush1.bf16.msra.mxu0 0
    %508 = vmatprep.subr.bf16.mxu0 0
    %509 = vmatpush1.bf16.msra.mxu0 0
    %510 = vmatprep.subr.bf16.mxu0 0
    %511 = vmatpush1.bf16.msra.mxu0 0
    %512 = vmatprep.mubr.bf16.mxu0 0
    %513 = vmatmul.mubr.bf16.gmra.mrb[0].mxu0 %v478
    %v514 = vpop.f32.mrb[0].mxu0
    %v515 = vadd.f32 0.0, %v514
    %v516 = vpop.f32.mrb[0].mxu0
    %v517 = vpop.f32.mrb[0].mxu0
    %v518 = vadd.f32 0.0, %v517
    %v519 = vpop.f32.mrb[0].mxu0
    %520 = vdwg.mxu0
    %v522 = vsel %vm344, %v476, 0
    %524 = vmatprep.subr.bf16.mxu0 0
    %525 = vmatpush1.bf16.msra.mxu0 %v343
    %526 = vmatprep.subr.bf16.mxu0 0
    %527 = vmatpush1.bf16.msra.mxu0 0
    %528 = vmatprep.subr.bf16.mxu0 0
    %529 = vmatpush1.bf16.msra.mxu0 0
    %530 = vmatprep.subr.bf16.mxu0 0
    %531 = vmatpush1.bf16.msra.mxu0 0
    %532 = vmatprep.subr.bf16.mxu0 0
    %533 = vmatpush1.bf16.msra.mxu0 0
    %534 = vmatprep.subr.bf16.mxu0 0
    %535 = vmatpush1.bf16.msra.mxu0 0
    %536 = vmatprep.subr.bf16.mxu0 0
    %537 = vmatpush1.bf16.msra.mxu0 0
    %538 = vmatprep.subr.bf16.mxu0 0
    %539 = vmatpush1.bf16.msra.mxu0 0
    %540 = vmatprep.subr.bf16.mxu0 0
    %541 = vmatpush1.bf16.msra.mxu0 0
    %542 = vmatprep.subr.bf16.mxu0 0
    %543 = vmatpush1.bf16.msra.mxu0 0
    %544 = vmatprep.subr.bf16.mxu0 0
    %545 = vmatpush1.bf16.msra.mxu0 0
    %546 = vmatprep.subr.bf16.mxu0 0
    %547 = vmatpush1.bf16.msra.mxu0 0
    %548 = vmatprep.subr.bf16.mxu0 0
    %549 = vmatpush1.bf16.msra.mxu0 0
    %550 = vmatprep.subr.bf16.mxu0 0
    %551 = vmatpush1.bf16.msra.mxu0 0
    %552 = vmatprep.subr.bf16.mxu0 0
    %553 = vmatpush1.bf16.msra.mxu0 0
    %554 = vmatprep.subr.bf16.mxu0 0
    %555 = vmatpush1.bf16.msra.mxu0 0
    %556 = vmatprep.mubr.bf16.mxu0 0
    %557 = vmatmul.mubr.bf16.gmra.mrb[0].mxu0 %v522
    %v558 = vpop.f32.mrb[0].mxu0
    %v559 = vadd.f32 0.0, %v558
    %v560 = vpop.f32.mrb[0].mxu0
    %v561 = vpop.f32.mrb[0].mxu0
    %v562 = vadd.f32 0.0, %v561
    %v563 = vpop.f32.mrb[0].mxu0
    %564 = vdwg.mxu0
    %v565 = vrcp.pop %v465
    %v566 = vrcp.pop %v468
    %v567 = vrcp.pop %v471
    %v568 = vrcp.pop %v474
    %v569 = vmul.f32 %v515, %v565
    %v570 = vmul.f32 %v518, %v566
    %v571 = vmul.f32 %v559, %v567
    %v572 = vmul.f32 %v562, %v568
    %v573 = vpack.c.bf16 %v570, %v569
    %v574 = vpack.c.bf16 %v572, %v571
    %576 = vrot.lane.b32.xlu0 %v338, 112
    %v577 = vpop.permute.xlu0 %576
    %579 = vrot.lane.b32.xlu0 %v339, 112
    %v580 = vpop.permute.xlu0 %579
    %v582 = vsel %vm344, %v577, 0
    %v585 = vsel %vm344, %v580, 0
    %587 = vmatprep.subr.bf16.mxu0 0
    %588 = vmatpush1.bf16.xpose.msra.mxu0 %v585
    %589 = vmatprep.subr.bf16.mxu0 0
    %590 = vmatpush1.bf16.xpose.msra.mxu0 0
    %591 = vmatprep.subr.bf16.mxu0 0
    %592 = vmatpush1.bf16.xpose.msra.mxu0 0
    %593 = vmatprep.subr.bf16.mxu0 0
    %594 = vmatpush1.bf16.xpose.msra.mxu0 0
    %595 = vmatprep.subr.bf16.mxu0 0
    %596 = vmatpush1.bf16.xpose.msra.mxu0 0
    %597 = vmatprep.subr.bf16.mxu0 0
    %598 = vmatpush1.bf16.xpose.msra.mxu0 0
    %599 = vmatprep.subr.bf16.mxu0 0
    %600 = vmatpush1.bf16.xpose.msra.mxu0 0
    %601 = vmatprep.subr.bf16.mxu0 0
    %602 = vmatpush1.bf16.xpose.msra.mxu0 0
    %603 = vmatprep.subr.bf16.mxu0 0
    %604 = vmatpush1.bf16.xpose.msra.mxu0 0
    %605 = vmatprep.subr.bf16.mxu0 0
    %606 = vmatpush1.bf16.xpose.msra.mxu0 0
    %607 = vmatprep.subr.bf16.mxu0 0
    %608 = vmatpush1.bf16.xpose.msra.mxu0 0
    %609 = vmatprep.subr.bf16.mxu0 0
    %610 = vmatpush1.bf16.xpose.msra.mxu0 0
    %611 = vmatprep.subr.bf16.mxu0 0
    %612 = vmatpush1.bf16.xpose.msra.mxu0 0
    %613 = vmatprep.subr.bf16.mxu0 0
    %614 = vmatpush1.bf16.xpose.msra.mxu0 0
    %615 = vmatprep.subr.bf16.mxu0 0
    %616 = vmatpush1.bf16.xpose.msra.mxu0 0
    %617 = vmatprep.subr.bf16.mxu0 0
    %618 = vmatpush1.bf16.xpose.msra.mxu0 0
    %619 = vmatprep.mubr.bf16.mxu0 0
    %620 = vmatmul.mubr.bf16.gmra.mrb[0].mxu0 %v582
    %v621 = vpop.f32.mrb[0].mxu0
    %v622 = vadd.f32 0.0, %v621
    %v623 = vpop.f32.mrb[0].mxu0
    %v624 = vpop.f32.mrb[0].mxu0
    %v625 = vadd.f32 0.0, %v624
    %v626 = vpop.f32.mrb[0].mxu0
    %627 = vdwg.mxu0
    %629 = vrot.lane.b32.xlu0 %v341, 112
    %v630 = vpop.permute.xlu0 %629
    %632 = vrot.lane.b32.xlu0 %v342, 112
    %v633 = vpop.permute.xlu0 %632
    %v635 = vsel %vm344, %v630, 0
    %v638 = vsel %vm344, %v633, 0
    %640 = vmatprep.subr.bf16.mxu0 0
    %641 = vmatpush1.bf16.xpose.msra.mxu0 %v638
    %642 = vmatprep.subr.bf16.mxu0 0
    %643 = vmatpush1.bf16.xpose.msra.mxu0 0
    %644 = vmatprep.subr.bf16.mxu0 0
    %645 = vmatpush1.bf16.xpose.msra.mxu0 0
    %646 = vmatprep.subr.bf16.mxu0 0
    %647 = vmatpush1.bf16.xpose.msra.mxu0 0
    %648 = vmatprep.subr.bf16.mxu0 0
    %649 = vmatpush1.bf16.xpose.msra.mxu0 0
    %650 = vmatprep.subr.bf16.mxu0 0
    %651 = vmatpush1.bf16.xpose.msra.mxu0 0
    %652 = vmatprep.subr.bf16.mxu0 0
    %653 = vmatpush1.bf16.xpose.msra.mxu0 0
    %654 = vmatprep.subr.bf16.mxu0 0
    %655 = vmatpush1.bf16.xpose.msra.mxu0 0
    %656 = vmatprep.subr.bf16.mxu0 0
    %657 = vmatpush1.bf16.xpose.msra.mxu0 0
    %658 = vmatprep.subr.bf16.mxu0 0
    %659 = vmatpush1.bf16.xpose.msra.mxu0 0
    %660 = vmatprep.subr.bf16.mxu0 0
    %661 = vmatpush1.bf16.xpose.msra.mxu0 0
    %662 = vmatprep.subr.bf16.mxu0 0
    %663 = vmatpush1.bf16.xpose.msra.mxu0 0
    %664 = vmatprep.subr.bf16.mxu0 0
    %665 = vmatpush1.bf16.xpose.msra.mxu0 0
    %666 = vmatprep.subr.bf16.mxu0 0
    %667 = vmatpush1.bf16.xpose.msra.mxu0 0
    %668 = vmatprep.subr.bf16.mxu0 0
    %669 = vmatpush1.bf16.xpose.msra.mxu0 0
    %670 = vmatprep.subr.bf16.mxu0 0
    %671 = vmatpush1.bf16.xpose.msra.mxu0 0
    %672 = vmatprep.mubr.bf16.mxu0 0
    %673 = vmatmul.mubr.bf16.gmra.mrb[0].mxu0 %v635
    %v674 = vpop.f32.mrb[0].mxu0
    %v675 = vadd.f32 0.0, %v674
    %v676 = vpop.f32.mrb[0].mxu0
    %v677 = vpop.f32.mrb[0].mxu0
    %v678 = vadd.f32 0.0, %v677
    %v679 = vpop.f32.mrb[0].mxu0
    %680 = vdwg.mxu0
    %v681 = vsel %vm344, %v622, -inf
    %682 = vmax.xlane.f32.xlu0 %v681
    %v683 = vpop.xlane.xlu0 %682
    %v684 = vsel %vm344, %v625, -inf
    %685 = vmax.xlane.f32.xlu0 %v684
    %v686 = vpop.xlane.xlu0 %685
    %v687 = vsel %vm344, %v675, -inf
    %688 = vmax.xlane.f32.xlu0 %v687
    %v689 = vpop.xlane.xlu0 %688
    %v690 = vsel %vm344, %v678, -inf
    %691 = vmax.xlane.f32.xlu0 %v690
    %v692 = vpop.xlane.xlu0 %691
    %v693 = vsub.f32 %v622, %v683
    %v694 = vsub.f32 %v625, %v686
    %v695 = vsub.f32 %v675, %v689
    %v696 = vsub.f32 %v678, %v692
    %v697 = vmul.f32 %v693, 1.442695
    %v698 = vpow.pop %v697
    %v699 = vmul.f32 %v694, 1.442695
    %v700 = vpow.pop %v699
    %v701 = vmul.f32 %v695, 1.442695
    %v702 = vpow.pop %v701
    %v703 = vmul.f32 %v696, 1.442695
    %v704 = vpow.pop %v703
    %v705 = vsel %vm344, %v698, 0.0
    %706 = vadd.xlane.f32.xlu0 %v705
    %v707 = vpop.xlane.xlu0 %706
    %v708 = vsel %vm344, %v700, 0.0
    %709 = vadd.xlane.f32.xlu0 %v708
    %v710 = vpop.xlane.xlu0 %709
    %v711 = vsel %vm344, %v702, 0.0
    %712 = vadd.xlane.f32.xlu0 %v711
    %v713 = vpop.xlane.xlu0 %712
    %v714 = vsel %vm344, %v704, 0.0
    %715 = vadd.xlane.f32.xlu0 %v714
    %v716 = vpop.xlane.xlu0 %715
    %v717 = vpack.c.bf16 %v700, %v698
    %v718 = vpack.c.bf16 %v704, %v702
    %720 = vrot.lane.b32.xlu0 %v340, 112
    %v721 = vpop.permute.xlu0 %720
    %v724 = vsel %vm344, %v717, 0
    %726 = vmatprep.subr.bf16.mxu0 0
    %727 = vmatpush1.bf16.msra.mxu0 %v721
    %728 = vmatprep.subr.bf16.mxu0 0
    %729 = vmatpush1.bf16.msra.mxu0 0
    %730 = vmatprep.subr.bf16.mxu0 0
    %731 = vmatpush1.bf16.msra.mxu0 0
    %732 = vmatprep.subr.bf16.mxu0 0
    %733 = vmatpush1.bf16.msra.mxu0 0
    %734 = vmatprep.subr.bf16.mxu0 0
    %735 = vmatpush1.bf16.msra.mxu0 0
    %736 = vmatprep.subr.bf16.mxu0 0
    %737 = vmatpush1.bf16.msra.mxu0 0
    %738 = vmatprep.subr.bf16.mxu0 0
    %739 = vmatpush1.bf16.msra.mxu0 0
    %740 = vmatprep.subr.bf16.mxu0 0
    %741 = vmatpush1.bf16.msra.mxu0 0
    %742 = vmatprep.subr.bf16.mxu0 0
    %743 = vmatpush1.bf16.msra.mxu0 0
    %744 = vmatprep.subr.bf16.mxu0 0
    %745 = vmatpush1.bf16.msra.mxu0 0
    %746 = vmatprep.subr.bf16.mxu0 0
    %747 = vmatpush1.bf16.msra.mxu0 0
    %748 = vmatprep.subr.bf16.mxu0 0
    %749 = vmatpush1.bf16.msra.mxu0 0
    %750 = vmatprep.subr.bf16.mxu0 0
    %751 = vmatpush1.bf16.msra.mxu0 0
    %752 = vmatprep.subr.bf16.mxu0 0
    %753 = vmatpush1.bf16.msra.mxu0 0
    %754 = vmatprep.subr.bf16.mxu0 0
    %755 = vmatpush1.bf16.msra.mxu0 0
    %756 = vmatprep.subr.bf16.mxu0 0
    %757 = vmatpush1.bf16.msra.mxu0 0
    %758 = vmatprep.mubr.bf16.mxu0 0
    %759 = vmatmul.mubr.bf16.gmra.mrb[0].mxu0 %v724
    %v760 = vpop.f32.mrb[0].mxu0
    %v761 = vadd.f32 0.0, %v760
    %v762 = vpop.f32.mrb[0].mxu0
    %v763 = vpop.f32.mrb[0].mxu0
    %v764 = vadd.f32 0.0, %v763
    %v765 = vpop.f32.mrb[0].mxu0
    %766 = vdwg.mxu0
    %768 = vrot.lane.b32.xlu0 %v343, 112
    %v769 = vpop.permute.xlu0 %768
    %v772 = vsel %vm344, %v718, 0
    %774 = vmatprep.subr.bf16.mxu0 0
    %775 = vmatpush1.bf16.msra.mxu0 %v769
    %776 = vmatprep.subr.bf16.mxu0 0
    %777 = vmatpush1.bf16.msra.mxu0 0
    %778 = vmatprep.subr.bf16.mxu0 0
    %779 = vmatpush1.bf16.msra.mxu0 0
    %780 = vmatprep.subr.bf16.mxu0 0
    %781 = vmatpush1.bf16.msra.mxu0 0
    %782 = vmatprep.subr.bf16.mxu0 0
    %783 = vmatpush1.bf16.msra.mxu0 0
    %784 = vmatprep.subr.bf16.mxu0 0
    %785 = vmatpush1.bf16.msra.mxu0 0
    %786 = vmatprep.subr.bf16.mxu0 0
    %787 = vmatpush1.bf16.msra.mxu0 0
    %788 = vmatprep.subr.bf16.mxu0 0
    %789 = vmatpush1.bf16.msra.mxu0 0
    %790 = vmatprep.subr.bf16.mxu0 0
    %791 = vmatpush1.bf16.msra.mxu0 0
    %792 = vmatprep.subr.bf16.mxu0 0
    %793 = vmatpush1.bf16.msra.mxu0 0
    %794 = vmatprep.subr.bf16.mxu0 0
    %795 = vmatpush1.bf16.msra.mxu0 0
    %796 = vmatprep.subr.bf16.mxu0 0
    %797 = vmatpush1.bf16.msra.mxu0 0
    %798 = vmatprep.subr.bf16.mxu0 0
    %799 = vmatpush1.bf16.msra.mxu0 0
    %800 = vmatprep.subr.bf16.mxu0 0
    %801 = vmatpush1.bf16.msra.mxu0 0
    %802 = vmatprep.subr.bf16.mxu0 0
    %803 = vmatpush1.bf16.msra.mxu0 0
    %804 = vmatprep.subr.bf16.mxu0 0
    %805 = vmatpush1.bf16.msra.mxu0 0
    %806 = vmatprep.mubr.bf16.mxu0 0
    %807 = vmatmul.mubr.bf16.gmra.mrb[0].mxu0 %v772
    %v808 = vpop.f32.mrb[0].mxu0
    %v809 = vadd.f32 0.0, %v808
    %v810 = vpop.f32.mrb[0].mxu0
    %v811 = vpop.f32.mrb[0].mxu0
    %v812 = vadd.f32 0.0, %v811
    %v813 = vpop.f32.mrb[0].mxu0
    %814 = vdwg.mxu0
    %v815 = vrcp.pop %v707
    %v816 = vrcp.pop %v710
    %v817 = vrcp.pop %v713
    %v818 = vrcp.pop %v716
    %v819 = vmul.f32 %v761, %v815
    %v820 = vmul.f32 %v764, %v816
    %v821 = vmul.f32 %v809, %v817
    %v822 = vmul.f32 %v812, %v818
    %v823 = vpack.c.bf16 %v820, %v819
    %v824 = vpack.c.bf16 %v822, %v821
    %825 = vrot.lane.b32.xlu0 %v338, 96
    %v826 = vpop.permute.xlu0 %825
    %827 = vrot.lane.b32.xlu0 %v339, 96
    %v828 = vpop.permute.xlu0 %827
    %v830 = vsel %vm344, %v826, 0
    %v833 = vsel %vm344, %v828, 0
    %835 = vmatprep.subr.bf16.mxu0 0
    %836 = vmatpush1.bf16.xpose.msra.mxu0 %v833
    %837 = vmatprep.subr.bf16.mxu0 0
    %838 = vmatpush1.bf16.xpose.msra.mxu0 0
    %839 = vmatprep.subr.bf16.mxu0 0
    %840 = vmatpush1.bf16.xpose.msra.mxu0 0
    %841 = vmatprep.subr.bf16.mxu0 0
    %842 = vmatpush1.bf16.xpose.msra.mxu0 0
    %843 = vmatprep.subr.bf16.mxu0 0
    %844 = vmatpush1.bf16.xpose.msra.mxu0 0
    %845 = vmatprep.subr.bf16.mxu0 0
    %846 = vmatpush1.bf16.xpose.msra.mxu0 0
    %847 = vmatprep.subr.bf16.mxu0 0
    %848 = vmatpush1.bf16.xpose.msra.mxu0 0
    %849 = vmatprep.subr.bf16.mxu0 0
    %850 = vmatpush1.bf16.xpose.msra.mxu0 0
    %851 = vmatprep.subr.bf16.mxu0 0
    %852 = vmatpush1.bf16.xpose.msra.mxu0 0
    %853 = vmatprep.subr.bf16.mxu0 0
    %854 = vmatpush1.bf16.xpose.msra.mxu0 0
    %855 = vmatprep.subr.bf16.mxu0 0
    %856 = vmatpush1.bf16.xpose.msra.mxu0 0
    %857 = vmatprep.subr.bf16.mxu0 0
    %858 = vmatpush1.bf16.xpose.msra.mxu0 0
    %859 = vmatprep.subr.bf16.mxu0 0
    %860 = vmatpush1.bf16.xpose.msra.mxu0 0
    %861 = vmatprep.subr.bf16.mxu0 0
    %862 = vmatpush1.bf16.xpose.msra.mxu0 0
    %863 = vmatprep.subr.bf16.mxu0 0
    %864 = vmatpush1.bf16.xpose.msra.mxu0 0
    %865 = vmatprep.subr.bf16.mxu0 0
    %866 = vmatpush1.bf16.xpose.msra.mxu0 0
    %867 = vmatprep.mubr.bf16.mxu0 0
    %868 = vmatmul.mubr.bf16.gmra.mrb[0].mxu0 %v830
    %v869 = vpop.f32.mrb[0].mxu0
    %v870 = vadd.f32 0.0, %v869
    %v871 = vpop.f32.mrb[0].mxu0
    %v872 = vpop.f32.mrb[0].mxu0
    %v873 = vadd.f32 0.0, %v872
    %v874 = vpop.f32.mrb[0].mxu0
    %875 = vdwg.mxu0
    %876 = vrot.lane.b32.xlu0 %v341, 96
    %v877 = vpop.permute.xlu0 %876
    %878 = vrot.lane.b32.xlu0 %v342, 96
    %v879 = vpop.permute.xlu0 %878
    %v881 = vsel %vm344, %v877, 0
    %v884 = vsel %vm344, %v879, 0
    %886 = vmatprep.subr.bf16.mxu0 0
    %887 = vmatpush1.bf16.xpose.msra.mxu0 %v884
    %888 = vmatprep.subr.bf16.mxu0 0
    %889 = vmatpush1.bf16.xpose.msra.mxu0 0
    %890 = vmatprep.subr.bf16.mxu0 0
    %891 = vmatpush1.bf16.xpose.msra.mxu0 0
    %892 = vmatprep.subr.bf16.mxu0 0
    %893 = vmatpush1.bf16.xpose.msra.mxu0 0
    %894 = vmatprep.subr.bf16.mxu0 0
    %895 = vmatpush1.bf16.xpose.msra.mxu0 0
    %896 = vmatprep.subr.bf16.mxu0 0
    %897 = vmatpush1.bf16.xpose.msra.mxu0 0
    %898 = vmatprep.subr.bf16.mxu0 0
    %899 = vmatpush1.bf16.xpose.msra.mxu0 0
    %900 = vmatprep.subr.bf16.mxu0 0
    %901 = vmatpush1.bf16.xpose.msra.mxu0 0
    %902 = vmatprep.subr.bf16.mxu0 0
    %903 = vmatpush1.bf16.xpose.msra.mxu0 0
    %904 = vmatprep.subr.bf16.mxu0 0
    %905 = vmatpush1.bf16.xpose.msra.mxu0 0
    %906 = vmatprep.subr.bf16.mxu0 0
    %907 = vmatpush1.bf16.xpose.msra.mxu0 0
    %908 = vmatprep.subr.bf16.mxu0 0
    %909 = vmatpush1.bf16.xpose.msra.mxu0 0
    %910 = vmatprep.subr.bf16.mxu0 0
    %911 = vmatpush1.bf16.xpose.msra.mxu0 0
    %912 = vmatprep.subr.bf16.mxu0 0
    %913 = vmatpush1.bf16.xpose.msra.mxu0 0
    %914 = vmatprep.subr.bf16.mxu0 0
    %915 = vmatpush1.bf16.xpose.msra.mxu0 0
    %916 = vmatprep.subr.bf16.mxu0 0
    %917 = vmatpush1.bf16.xpose.msra.mxu0 0
    %918 = vmatprep.mubr.bf16.mxu0 0
    %919 = vmatmul.mubr.bf16.gmra.mrb[0].mxu0 %v881
    %v920 = vpop.f32.mrb[0].mxu0
    %v921 = vadd.f32 0.0, %v920
    %v922 = vpop.f32.mrb[0].mxu0
    %v923 = vpop.f32.mrb[0].mxu0
    %v924 = vadd.f32 0.0, %v923
    %v925 = vpop.f32.mrb[0].mxu0
    %926 = vdwg.mxu0
    %v927 = vsel %vm344, %v870, -inf
    %928 = vmax.xlane.f32.xlu0 %v927
    %v929 = vpop.xlane.xlu0 %928
    %v930 = vsel %vm344, %v873, -inf
    %931 = vmax.xlane.f32.xlu0 %v930
    %v932 = vpop.xlane.xlu0 %931
    %v933 = vsel %vm344, %v921, -inf
    %934 = vmax.xlane.f32.xlu0 %v933
    %v935 = vpop.xlane.xlu0 %934
    %v936 = vsel %vm344, %v924, -inf
    %937 = vmax.xlane.f32.xlu0 %v936
    %v938 = vpop.xlane.xlu0 %937
    %v939 = vsub.f32 %v870, %v929
    %v940 = vsub.f32 %v873, %v932
    %v941 = vsub.f32 %v921, %v935
    %v942 = vsub.f32 %v924, %v938
    %v943 = vmul.f32 %v939, 1.442695
    %v944 = vpow.pop %v943
    %v945 = vmul.f32 %v940, 1.442695
    %v946 = vpow.pop %v945
    %v947 = vmul.f32 %v941, 1.442695
    %v948 = vpow.pop %v947
    %v949 = vmul.f32 %v942, 1.442695
    %v950 = vpow.pop %v949
    %v951 = vsel %vm344, %v944, 0.0
    %952 = vadd.xlane.f32.xlu0 %v951
    %v953 = vpop.xlane.xlu0 %952
    %v954 = vsel %vm344, %v946, 0.0
    %955 = vadd.xlane.f32.xlu0 %v954
    %v956 = vpop.xlane.xlu0 %955
    %v957 = vsel %vm344, %v948, 0.0
    %958 = vadd.xlane.f32.xlu0 %v957
    %v959 = vpop.xlane.xlu0 %958
    %v960 = vsel %vm344, %v950, 0.0
    %961 = vadd.xlane.f32.xlu0 %v960
    %v962 = vpop.xlane.xlu0 %961
    %v963 = vpack.c.bf16 %v946, %v944
    %v964 = vpack.c.bf16 %v950, %v948
    %965 = vrot.lane.b32.xlu0 %v340, 96
    %v966 = vpop.permute.xlu0 %965
    %v969 = vsel %vm344, %v963, 0
    %971 = vmatprep.subr.bf16.mxu0 0
    %972 = vmatpush1.bf16.msra.mxu0 %v966
    %973 = vmatprep.subr.bf16.mxu0 0
    %974 = vmatpush1.bf16.msra.mxu0 0
    %975 = vmatprep.subr.bf16.mxu0 0
    %976 = vmatpush1.bf16.msra.mxu0 0
    %977 = vmatprep.subr.bf16.mxu0 0
    %978 = vmatpush1.bf16.msra.mxu0 0
    %979 = vmatprep.subr.bf16.mxu0 0
    %980 = vmatpush1.bf16.msra.mxu0 0
    %981 = vmatprep.subr.bf16.mxu0 0
    %982 = vmatpush1.bf16.msra.mxu0 0
    %983 = vmatprep.subr.bf16.mxu0 0
    %984 = vmatpush1.bf16.msra.mxu0 0
    %985 = vmatprep.subr.bf16.mxu0 0
    %986 = vmatpush1.bf16.msra.mxu0 0
    %987 = vmatprep.subr.bf16.mxu0 0
    %988 = vmatpush1.bf16.msra.mxu0 0
    %989 = vmatprep.subr.bf16.mxu0 0
    %990 = vmatpush1.bf16.msra.mxu0 0
    %991 = vmatprep.subr.bf16.mxu0 0
    %992 = vmatpush1.bf16.msra.mxu0 0
    %993 = vmatprep.subr.bf16.mxu0 0
    %994 = vmatpush1.bf16.msra.mxu0 0
    %995 = vmatprep.subr.bf16.mxu0 0
    %996 = vmatpush1.bf16.msra.mxu0 0
    %997 = vmatprep.subr.bf16.mxu0 0
    %998 = vmatpush1.bf16.msra.mxu0 0
    %999 = vmatprep.subr.bf16.mxu0 0
    %1000 = vmatpush1.bf16.msra.mxu0 0
    %1001 = vmatprep.subr.bf16.mxu0 0
    %1002 = vmatpush1.bf16.msra.mxu0 0
    %1003 = vmatprep.mubr.bf16.mxu0 0
    %1004 = vmatmul.mubr.bf16.gmra.mrb[0].mxu0 %v969
    %v1005 = vpop.f32.mrb[0].mxu0
    %v1006 = vadd.f32 0.0, %v1005
    %v1007 = vpop.f32.mrb[0].mxu0
    %v1008 = vpop.f32.mrb[0].mxu0
    %v1009 = vadd.f32 0.0, %v1008
    %v1010 = vpop.f32.mrb[0].mxu0
    %1011 = vdwg.mxu0
    %1012 = vrot.lane.b32.xlu0 %v343, 96
    %v1013 = vpop.permute.xlu0 %1012
    %v1016 = vsel %vm344, %v964, 0
    %1018 = vmatprep.subr.bf16.mxu0 0
    %1019 = vmatpush1.bf16.msra.mxu0 %v1013
    %1020 = vmatprep.subr.bf16.mxu0 0
    %1021 = vmatpush1.bf16.msra.mxu0 0
    %1022 = vmatprep.subr.bf16.mxu0 0
    %1023 = vmatpush1.bf16.msra.mxu0 0
    %1024 = vmatprep.subr.bf16.mxu0 0
    %1025 = vmatpush1.bf16.msra.mxu0 0
    %1026 = vmatprep.subr.bf16.mxu0 0
    %1027 = vmatpush1.bf16.msra.mxu0 0
    %1028 = vmatprep.subr.bf16.mxu0 0
    %1029 = vmatpush1.bf16.msra.mxu0 0
    %1030 = vmatprep.subr.bf16.mxu0 0
    %1031 = vmatpush1.bf16.msra.mxu0 0
    %1032 = vmatprep.subr.bf16.mxu0 0
    %1033 = vmatpush1.bf16.msra.mxu0 0
    %1034 = vmatprep.subr.bf16.mxu0 0
    %1035 = vmatpush1.bf16.msra.mxu0 0
    %1036 = vmatprep.subr.bf16.mxu0 0
    %1037 = vmatpush1.bf16.msra.mxu0 0
    %1038 = vmatprep.subr.bf16.mxu0 0
    %1039 = vmatpush1.bf16.msra.mxu0 0
    %1040 = vmatprep.subr.bf16.mxu0 0
    %1041 = vmatpush1.bf16.msra.mxu0 0
    %1042 = vmatprep.subr.bf16.mxu0 0
    %1043 = vmatpush1.bf16.msra.mxu0 0
    %1044 = vmatprep.subr.bf16.mxu0 0
    %1045 = vmatpush1.bf16.msra.mxu0 0
    %1046 = vmatprep.subr.bf16.mxu0 0
    %1047 = vmatpush1.bf16.msra.mxu0 0
    %1048 = vmatprep.subr.bf16.mxu0 0
    %1049 = vmatpush1.bf16.msra.mxu0 0
    %1050 = vmatprep.mubr.bf16.mxu0 0
    %1051 = vmatmul.mubr.bf16.gmra.mrb[0].mxu0 %v1016
    %v1052 = vpop.f32.mrb[0].mxu0
    %v1053 = vadd.f32 0.0, %v1052
    %v1054 = vpop.f32.mrb[0].mxu0
    %v1055 = vpop.f32.mrb[0].mxu0
    %v1056 = vadd.f32 0.0, %v1055
    %v1057 = vpop.f32.mrb[0].mxu0
    %1058 = vdwg.mxu0
    %v1059 = vrcp.pop %v953
    %v1060 = vrcp.pop %v956
    %v1061 = vrcp.pop %v959
    %v1062 = vrcp.pop %v962
    %v1063 = vmul.f32 %v1006, %v1059
    %v1064 = vmul.f32 %v1009, %v1060
    %v1065 = vmul.f32 %v1053, %v1061
    %v1066 = vmul.f32 %v1056, %v1062
    %v1067 = vpack.c.bf16 %v1064, %v1063
    %v1068 = vpack.c.bf16 %v1066, %v1065
    %1069 = vrot.lane.b32.xlu0 %v338, 80
    %v1070 = vpop.permute.xlu0 %1069
    %1071 = vrot.lane.b32.xlu0 %v339, 80
    %v1072 = vpop.permute.xlu0 %1071
    %v1074 = vsel %vm344, %v1070, 0
    %v1077 = vsel %vm344, %v1072, 0
    %1079 = vmatprep.subr.bf16.mxu0 0
    %1080 = vmatpush1.bf16.xpose.msra.mxu0 %v1077
    %1081 = vmatprep.subr.bf16.mxu0 0
    %1082 = vmatpush1.bf16.xpose.msra.mxu0 0
    %1083 = vmatprep.subr.bf16.mxu0 0
    %1084 = vmatpush1.bf16.xpose.msra.mxu0 0
    %1085 = vmatprep.subr.bf16.mxu0 0
    %1086 = vmatpush1.bf16.xpose.msra.mxu0 0
    %1087 = vmatprep.subr.bf16.mxu0 0
    %1088 = vmatpush1.bf16.xpose.msra.mxu0 0
    %1089 = vmatprep.subr.bf16.mxu0 0
    %1090 = vmatpush1.bf16.xpose.msra.mxu0 0
    %1091 = vmatprep.subr.bf16.mxu0 0
    %1092 = vmatpush1.bf16.xpose.msra.mxu0 0
    %1093 = vmatprep.subr.bf16.mxu0 0
    %1094 = vmatpush1.bf16.xpose.msra.mxu0 0
    %1095 = vmatprep.subr.bf16.mxu0 0
    %1096 = vmatpush1.bf16.xpose.msra.mxu0 0
    %1097 = vmatprep.subr.bf16.mxu0 0
    %1098 = vmatpush1.bf16.xpose.msra.mxu0 0
    %1099 = vmatprep.subr.bf16.mxu0 0
    %1100 = vmatpush1.bf16.xpose.msra.mxu0 0
    %1101 = vmatprep.subr.bf16.mxu0 0
    %1102 = vmatpush1.bf16.xpose.msra.mxu0 0
    %1103 = vmatprep.subr.bf16.mxu0 0
    %1104 = vmatpush1.bf16.xpose.msra.mxu0 0
    %1105 = vmatprep.subr.bf16.mxu0 0
    %1106 = vmatpush1.bf16.xpose.msra.mxu0 0
    %1107 = vmatprep.subr.bf16.mxu0 0
    %1108 = vmatpush1.bf16.xpose.msra.mxu0 0
    %1109 = vmatprep.subr.bf16.mxu0 0
    %1110 = vmatpush1.bf16.xpose.msra.mxu0 0
    %1111 = vmatprep.mubr.bf16.mxu0 0
    %1112 = vmatmul.mubr.bf16.gmra.mrb[0].mxu0 %v1074
    %v1113 = vpop.f32.mrb[0].mxu0
    %v1114 = vadd.f32 0.0, %v1113
    %v1115 = vpop.f32.mrb[0].mxu0
    %v1116 = vpop.f32.mrb[0].mxu0
    %v1117 = vadd.f32 0.0, %v1116
    %v1118 = vpop.f32.mrb[0].mxu0
    %1119 = vdwg.mxu0
    %1120 = vrot.lane.b32.xlu0 %v341, 80
    %v1121 = vpop.permute.xlu0 %1120
    %1122 = vrot.lane.b32.xlu0 %v342, 80
    %v1123 = vpop.permute.xlu0 %1122
    %v1125 = vsel %vm344, %v1121, 0
    %v1128 = vsel %vm344, %v1123, 0
    %1130 = vmatprep.subr.bf16.mxu0 0
    %1131 = vmatpush1.bf16.xpose.msra.mxu0 %v1128
    %1132 = vmatprep.subr.bf16.mxu0 0
    %1133 = vmatpush1.bf16.xpose.msra.mxu0 0
    %1134 = vmatprep.subr.bf16.mxu0 0
    %1135 = vmatpush1.bf16.xpose.msra.mxu0 0
    %1136 = vmatprep.subr.bf16.mxu0 0
    %1137 = vmatpush1.bf16.xpose.msra.mxu0 0
    %1138 = vmatprep.subr.bf16.mxu0 0
    %1139 = vmatpush1.bf16.xpose.msra.mxu0 0
    %1140 = vmatprep.subr.bf16.mxu0 0
    %1141 = vmatpush1.bf16.xpose.msra.mxu0 0
    %1142 = vmatprep.subr.bf16.mxu0 0
    %1143 = vmatpush1.bf16.xpose.msra.mxu0 0
    %1144 = vmatprep.subr.bf16.mxu0 0
    %1145 = vmatpush1.bf16.xpose.msra.mxu0 0
    %1146 = vmatprep.subr.bf16.mxu0 0
    %1147 = vmatpush1.bf16.xpose.msra.mxu0 0
    %1148 = vmatprep.subr.bf16.mxu0 0
    %1149 = vmatpush1.bf16.xpose.msra.mxu0 0
    %1150 = vmatprep.subr.bf16.mxu0 0
    %1151 = vmatpush1.bf16.xpose.msra.mxu0 0
    %1152 = vmatprep.subr.bf16.mxu0 0
    %1153 = vmatpush1.bf16.xpose.msra.mxu0 0
    %1154 = vmatprep.subr.bf16.mxu0 0
    %1155 = vmatpush1.bf16.xpose.msra.mxu0 0
    %1156 = vmatprep.subr.bf16.mxu0 0
    %1157 = vmatpush1.bf16.xpose.msra.mxu0 0
    %1158 = vmatprep.subr.bf16.mxu0 0
    %1159 = vmatpush1.bf16.xpose.msra.mxu0 0
    %1160 = vmatprep.subr.bf16.mxu0 0
    %1161 = vmatpush1.bf16.xpose.msra.mxu0 0
    %1162 = vmatprep.mubr.bf16.mxu0 0
    %1163 = vmatmul.mubr.bf16.gmra.mrb[0].mxu0 %v1125
    %v1164 = vpop.f32.mrb[0].mxu0
    %v1165 = vadd.f32 0.0, %v1164
    %v1166 = vpop.f32.mrb[0].mxu0
    %v1167 = vpop.f32.mrb[0].mxu0
    %v1168 = vadd.f32 0.0, %v1167
    %v1169 = vpop.f32.mrb[0].mxu0
    %1170 = vdwg.mxu0
    %v1171 = vsel %vm344, %v1114, -inf
    %1172 = vmax.xlane.f32.xlu0 %v1171
    %v1173 = vpop.xlane.xlu0 %1172
    %v1174 = vsel %vm344, %v1117, -inf
    %1175 = vmax.xlane.f32.xlu0 %v1174
    %v1176 = vpop.xlane.xlu0 %1175
    %v1177 = vsel %vm344, %v1165, -inf
    %1178 = vmax.xlane.f32.xlu0 %v1177
    %v1179 = vpop.xlane.xlu0 %1178
    %v1180 = vsel %vm344, %v1168, -inf
    %1181 = vmax.xlane.f32.xlu0 %v1180
    %v1182 = vpop.xlane.xlu0 %1181
    %v1183 = vsub.f32 %v1114, %v1173
    %v1184 = vsub.f32 %v1117, %v1176
    %v1185 = vsub.f32 %v1165, %v1179
    %v1186 = vsub.f32 %v1168, %v1182
    %v1187 = vmul.f32 %v1183, 1.442695
    %v1188 = vpow.pop %v1187
    %v1189 = vmul.f32 %v1184, 1.442695
    %v1190 = vpow.pop %v1189
    %v1191 = vmul.f32 %v1185, 1.442695
    %v1192 = vpow.pop %v1191
    %v1193 = vmul.f32 %v1186, 1.442695
    %v1194 = vpow.pop %v1193
    %v1195 = vsel %vm344, %v1188, 0.0
    %1196 = vadd.xlane.f32.xlu0 %v1195
    %v1197 = vpop.xlane.xlu0 %1196
    %v1198 = vsel %vm344, %v1190, 0.0
    %1199 = vadd.xlane.f32.xlu0 %v1198
    %v1200 = vpop.xlane.xlu0 %1199
    %v1201 = vsel %vm344, %v1192, 0.0
    %1202 = vadd.xlane.f32.xlu0 %v1201
    %v1203 = vpop.xlane.xlu0 %1202
    %v1204 = vsel %vm344, %v1194, 0.0
    %1205 = vadd.xlane.f32.xlu0 %v1204
    %v1206 = vpop.xlane.xlu0 %1205
    %v1207 = vpack.c.bf16 %v1190, %v1188
    %v1208 = vpack.c.bf16 %v1194, %v1192
    %1209 = vrot.lane.b32.xlu0 %v340, 80
    %v1210 = vpop.permute.xlu0 %1209
    %v1213 = vsel %vm344, %v1207, 0
    %1215 = vmatprep.subr.bf16.mxu0 0
    %1216 = vmatpush1.bf16.msra.mxu0 %v1210
    %1217 = vmatprep.subr.bf16.mxu0 0
    %1218 = vmatpush1.bf16.msra.mxu0 0
    %1219 = vmatprep.subr.bf16.mxu0 0
    %1220 = vmatpush1.bf16.msra.mxu0 0
    %1221 = vmatprep.subr.bf16.mxu0 0
    %1222 = vmatpush1.bf16.msra.mxu0 0
    %1223 = vmatprep.subr.bf16.mxu0 0
    %1224 = vmatpush1.bf16.msra.mxu0 0
    %1225 = vmatprep.subr.bf16.mxu0 0
    %1226 = vmatpush1.bf16.msra.mxu0 0
    %1227 = vmatprep.subr.bf16.mxu0 0
    %1228 = vmatpush1.bf16.msra.mxu0 0
    %1229 = vmatprep.subr.bf16.mxu0 0
    %1230 = vmatpush1.bf16.msra.mxu0 0
    %1231 = vmatprep.subr.bf16.mxu0 0
    %1232 = vmatpush1.bf16.msra.mxu0 0
    %1233 = vmatprep.subr.bf16.mxu0 0
    %1234 = vmatpush1.bf16.msra.mxu0 0
    %1235 = vmatprep.subr.bf16.mxu0 0
    %1236 = vmatpush1.bf16.msra.mxu0 0
    %1237 = vmatprep.subr.bf16.mxu0 0
    %1238 = vmatpush1.bf16.msra.mxu0 0
    %1239 = vmatprep.subr.bf16.mxu0 0
    %1240 = vmatpush1.bf16.msra.mxu0 0
    %1241 = vmatprep.subr.bf16.mxu0 0
    %1242 = vmatpush1.bf16.msra.mxu0 0
    %1243 = vmatprep.subr.bf16.mxu0 0
    %1244 = vmatpush1.bf16.msra.mxu0 0
    %1245 = vmatprep.subr.bf16.mxu0 0
    %1246 = vmatpush1.bf16.msra.mxu0 0
    %1247 = vmatprep.mubr.bf16.mxu0 0
    %1248 = vmatmul.mubr.bf16.gmra.mrb[0].mxu0 %v1213
    %v1249 = vpop.f32.mrb[0].mxu0
    %v1250 = vadd.f32 0.0, %v1249
    %v1251 = vpop.f32.mrb[0].mxu0
    %v1252 = vpop.f32.mrb[0].mxu0
    %v1253 = vadd.f32 0.0, %v1252
    %v1254 = vpop.f32.mrb[0].mxu0
    %1255 = vdwg.mxu0
    %1256 = vrot.lane.b32.xlu0 %v343, 80
    %v1257 = vpop.permute.xlu0 %1256
    %v1260 = vsel %vm344, %v1208, 0
    %1262 = vmatprep.subr.bf16.mxu0 0
    %1263 = vmatpush1.bf16.msra.mxu0 %v1257
    %1264 = vmatprep.subr.bf16.mxu0 0
    %1265 = vmatpush1.bf16.msra.mxu0 0
    %1266 = vmatprep.subr.bf16.mxu0 0
    %1267 = vmatpush1.bf16.msra.mxu0 0
    %1268 = vmatprep.subr.bf16.mxu0 0
    %1269 = vmatpush1.bf16.msra.mxu0 0
    %1270 = vmatprep.subr.bf16.mxu0 0
    %1271 = vmatpush1.bf16.msra.mxu0 0
    %1272 = vmatprep.subr.bf16.mxu0 0
    %1273 = vmatpush1.bf16.msra.mxu0 0
    %1274 = vmatprep.subr.bf16.mxu0 0
    %1275 = vmatpush1.bf16.msra.mxu0 0
    %1276 = vmatprep.subr.bf16.mxu0 0
    %1277 = vmatpush1.bf16.msra.mxu0 0
    %1278 = vmatprep.subr.bf16.mxu0 0
    %1279 = vmatpush1.bf16.msra.mxu0 0
    %1280 = vmatprep.subr.bf16.mxu0 0
    %1281 = vmatpush1.bf16.msra.mxu0 0
    %1282 = vmatprep.subr.bf16.mxu0 0
    %1283 = vmatpush1.bf16.msra.mxu0 0
    %1284 = vmatprep.subr.bf16.mxu0 0
    %1285 = vmatpush1.bf16.msra.mxu0 0
    %1286 = vmatprep.subr.bf16.mxu0 0
    %1287 = vmatpush1.bf16.msra.mxu0 0
    %1288 = vmatprep.subr.bf16.mxu0 0
    %1289 = vmatpush1.bf16.msra.mxu0 0
    %1290 = vmatprep.subr.bf16.mxu0 0
    %1291 = vmatpush1.bf16.msra.mxu0 0
    %1292 = vmatprep.subr.bf16.mxu0 0
    %1293 = vmatpush1.bf16.msra.mxu0 0
    %1294 = vmatprep.mubr.bf16.mxu0 0
    %1295 = vmatmul.mubr.bf16.gmra.mrb[0].mxu0 %v1260
    %v1296 = vpop.f32.mrb[0].mxu0
    %v1297 = vadd.f32 0.0, %v1296
    %v1298 = vpop.f32.mrb[0].mxu0
    %v1299 = vpop.f32.mrb[0].mxu0
    %v1300 = vadd.f32 0.0, %v1299
    %v1301 = vpop.f32.mrb[0].mxu0
    %1302 = vdwg.mxu0
    %v1303 = vrcp.pop %v1197
    %v1304 = vrcp.pop %v1200
    %v1305 = vrcp.pop %v1203
    %v1306 = vrcp.pop %v1206
    %v1307 = vmul.f32 %v1250, %v1303
    %v1308 = vmul.f32 %v1253, %v1304
    %v1309 = vmul.f32 %v1297, %v1305
    %v1310 = vmul.f32 %v1300, %v1306
    %v1311 = vpack.c.bf16 %v1308, %v1307
    %v1312 = vpack.c.bf16 %v1310, %v1309
    %1313 = vrot.lane.b32.xlu0 %v338, 64
    %v1314 = vpop.permute.xlu0 %1313
    %1315 = vrot.lane.b32.xlu0 %v339, 64
    %v1316 = vpop.permute.xlu0 %1315
    %v1318 = vsel %vm344, %v1314, 0
    %v1321 = vsel %vm344, %v1316, 0
    %1323 = vmatprep.subr.bf16.mxu0 0
    %1324 = vmatpush1.bf16.xpose.msra.mxu0 %v1321
    %1325 = vmatprep.subr.bf16.mxu0 0
    %1326 = vmatpush1.bf16.xpose.msra.mxu0 0
    %1327 = vmatprep.subr.bf16.mxu0 0
    %1328 = vmatpush1.bf16.xpose.msra.mxu0 0
    %1329 = vmatprep.subr.bf16.mxu0 0
    %1330 = vmatpush1.bf16.xpose.msra.mxu0 0
    %1331 = vmatprep.subr.bf16.mxu0 0
    %1332 = vmatpush1.bf16.xpose.msra.mxu0 0
    %1333 = vmatprep.subr.bf16.mxu0 0
    %1334 = vmatpush1.bf16.xpose.msra.mxu0 0
    %1335 = vmatprep.subr.bf16.mxu0 0
    %1336 = vmatpush1.bf16.xpose.msra.mxu0 0
    %1337 = vmatprep.subr.bf16.mxu0 0
    %1338 = vmatpush1.bf16.xpose.msra.mxu0 0
    %1339 = vmatprep.subr.bf16.mxu0 0
    %1340 = vmatpush1.bf16.xpose.msra.mxu0 0
    %1341 = vmatprep.subr.bf16.mxu0 0
    %1342 = vmatpush1.bf16.xpose.msra.mxu0 0
    %1343 = vmatprep.subr.bf16.mxu0 0
    %1344 = vmatpush1.bf16.xpose.msra.mxu0 0
    %1345 = vmatprep.subr.bf16.mxu0 0
    %1346 = vmatpush1.bf16.xpose.msra.mxu0 0
    %1347 = vmatprep.subr.bf16.mxu0 0
    %1348 = vmatpush1.bf16.xpose.msra.mxu0 0
    %1349 = vmatprep.subr.bf16.mxu0 0
    %1350 = vmatpush1.bf16.xpose.msra.mxu0 0
    %1351 = vmatprep.subr.bf16.mxu0 0
    %1352 = vmatpush1.bf16.xpose.msra.mxu0 0
    %1353 = vmatprep.subr.bf16.mxu0 0
    %1354 = vmatpush1.bf16.xpose.msra.mxu0 0
    %1355 = vmatprep.mubr.bf16.mxu0 0
    %1356 = vmatmul.mubr.bf16.gmra.mrb[0].mxu0 %v1318
    %v1357 = vpop.f32.mrb[0].mxu0
    %v1358 = vadd.f32 0.0, %v1357
    %v1359 = vpop.f32.mrb[0].mxu0
    %v1360 = vpop.f32.mrb[0].mxu0
    %v1361 = vadd.f32 0.0, %v1360
    %v1362 = vpop.f32.mrb[0].mxu0
    %1363 = vdwg.mxu0
    %1364 = vrot.lane.b32.xlu0 %v341, 64
    %v1365 = vpop.permute.xlu0 %1364
    %1366 = vrot.lane.b32.xlu0 %v342, 64
    %v1367 = vpop.permute.xlu0 %1366
    %v1369 = vsel %vm344, %v1365, 0
    %v1372 = vsel %vm344, %v1367, 0
    %1374 = vmatprep.subr.bf16.mxu0 0
    %1375 = vmatpush1.bf16.xpose.msra.mxu0 %v1372
    %1376 = vmatprep.subr.bf16.mxu0 0
    %1377 = vmatpush1.bf16.xpose.msra.mxu0 0
    %1378 = vmatprep.subr.bf16.mxu0 0
    %1379 = vmatpush1.bf16.xpose.msra.mxu0 0
    %1380 = vmatprep.subr.bf16.mxu0 0
    %1381 = vmatpush1.bf16.xpose.msra.mxu0 0
    %1382 = vmatprep.subr.bf16.mxu0 0
    %1383 = vmatpush1.bf16.xpose.msra.mxu0 0
    %1384 = vmatprep.subr.bf16.mxu0 0
    %1385 = vmatpush1.bf16.xpose.msra.mxu0 0
    %1386 = vmatprep.subr.bf16.mxu0 0
    %1387 = vmatpush1.bf16.xpose.msra.mxu0 0
    %1388 = vmatprep.subr.bf16.mxu0 0
    %1389 = vmatpush1.bf16.xpose.msra.mxu0 0
    %1390 = vmatprep.subr.bf16.mxu0 0
    %1391 = vmatpush1.bf16.xpose.msra.mxu0 0
    %1392 = vmatprep.subr.bf16.mxu0 0
    %1393 = vmatpush1.bf16.xpose.msra.mxu0 0
    %1394 = vmatprep.subr.bf16.mxu0 0
    %1395 = vmatpush1.bf16.xpose.msra.mxu0 0
    %1396 = vmatprep.subr.bf16.mxu0 0
    %1397 = vmatpush1.bf16.xpose.msra.mxu0 0
    %1398 = vmatprep.subr.bf16.mxu0 0
    %1399 = vmatpush1.bf16.xpose.msra.mxu0 0
    %1400 = vmatprep.subr.bf16.mxu0 0
    %1401 = vmatpush1.bf16.xpose.msra.mxu0 0
    %1402 = vmatprep.subr.bf16.mxu0 0
    %1403 = vmatpush1.bf16.xpose.msra.mxu0 0
    %1404 = vmatprep.subr.bf16.mxu0 0
    %1405 = vmatpush1.bf16.xpose.msra.mxu0 0
    %1406 = vmatprep.mubr.bf16.mxu0 0
    %1407 = vmatmul.mubr.bf16.gmra.mrb[0].mxu0 %v1369
    %v1408 = vpop.f32.mrb[0].mxu0
    %v1409 = vadd.f32 0.0, %v1408
    %v1410 = vpop.f32.mrb[0].mxu0
    %v1411 = vpop.f32.mrb[0].mxu0
    %v1412 = vadd.f32 0.0, %v1411
    %v1413 = vpop.f32.mrb[0].mxu0
    %1414 = vdwg.mxu0
    %v1415 = vsel %vm344, %v1358, -inf
    %1416 = vmax.xlane.f32.xlu0 %v1415
    %v1417 = vpop.xlane.xlu0 %1416
    %v1418 = vsel %vm344, %v1361, -inf
    %1419 = vmax.xlane.f32.xlu0 %v1418
    %v1420 = vpop.xlane.xlu0 %1419
    %v1421 = vsel %vm344, %v1409, -inf
    %1422 = vmax.xlane.f32.xlu0 %v1421
    %v1423 = vpop.xlane.xlu0 %1422
    %v1424 = vsel %vm344, %v1412, -inf
    %1425 = vmax.xlane.f32.xlu0 %v1424
    %v1426 = vpop.xlane.xlu0 %1425
    %v1427 = vsub.f32 %v1358, %v1417
    %v1428 = vsub.f32 %v1361, %v1420
    %v1429 = vsub.f32 %v1409, %v1423
    %v1430 = vsub.f32 %v1412, %v1426
    %v1431 = vmul.f32 %v1427, 1.442695
    %v1432 = vpow.pop %v1431
    %v1433 = vmul.f32 %v1428, 1.442695
    %v1434 = vpow.pop %v1433
    %v1435 = vmul.f32 %v1429, 1.442695
    %v1436 = vpow.pop %v1435
    %v1437 = vmul.f32 %v1430, 1.442695
    %v1438 = vpow.pop %v1437
    %v1439 = vsel %vm344, %v1432, 0.0
    %1440 = vadd.xlane.f32.xlu0 %v1439
    %v1441 = vpop.xlane.xlu0 %1440
    %v1442 = vsel %vm344, %v1434, 0.0
    %1443 = vadd.xlane.f32.xlu0 %v1442
    %v1444 = vpop.xlane.xlu0 %1443
    %v1445 = vsel %vm344, %v1436, 0.0
    %1446 = vadd.xlane.f32.xlu0 %v1445
    %v1447 = vpop.xlane.xlu0 %1446
    %v1448 = vsel %vm344, %v1438, 0.0
    %1449 = vadd.xlane.f32.xlu0 %v1448
    %v1450 = vpop.xlane.xlu0 %1449
    %v1451 = vpack.c.bf16 %v1434, %v1432
    %v1452 = vpack.c.bf16 %v1438, %v1436
    %1453 = vrot.lane.b32.xlu0 %v340, 64
    %v1454 = vpop.permute.xlu0 %1453
    %v1457 = vsel %vm344, %v1451, 0
    %1459 = vmatprep.subr.bf16.mxu0 0
    %1460 = vmatpush1.bf16.msra.mxu0 %v1454
    %1461 = vmatprep.subr.bf16.mxu0 0
    %1462 = vmatpush1.bf16.msra.mxu0 0
    %1463 = vmatprep.subr.bf16.mxu0 0
    %1464 = vmatpush1.bf16.msra.mxu0 0
    %1465 = vmatprep.subr.bf16.mxu0 0
    %1466 = vmatpush1.bf16.msra.mxu0 0
    %1467 = vmatprep.subr.bf16.mxu0 0
    %1468 = vmatpush1.bf16.msra.mxu0 0
    %1469 = vmatprep.subr.bf16.mxu0 0
    %1470 = vmatpush1.bf16.msra.mxu0 0
    %1471 = vmatprep.subr.bf16.mxu0 0
    %1472 = vmatpush1.bf16.msra.mxu0 0
    %1473 = vmatprep.subr.bf16.mxu0 0
    %1474 = vmatpush1.bf16.msra.mxu0 0
    %1475 = vmatprep.subr.bf16.mxu0 0
    %1476 = vmatpush1.bf16.msra.mxu0 0
    %1477 = vmatprep.subr.bf16.mxu0 0
    %1478 = vmatpush1.bf16.msra.mxu0 0
    %1479 = vmatprep.subr.bf16.mxu0 0
    %1480 = vmatpush1.bf16.msra.mxu0 0
    %1481 = vmatprep.subr.bf16.mxu0 0
    %1482 = vmatpush1.bf16.msra.mxu0 0
    %1483 = vmatprep.subr.bf16.mxu0 0
    %1484 = vmatpush1.bf16.msra.mxu0 0
    %1485 = vmatprep.subr.bf16.mxu0 0
    %1486 = vmatpush1.bf16.msra.mxu0 0
    %1487 = vmatprep.subr.bf16.mxu0 0
    %1488 = vmatpush1.bf16.msra.mxu0 0
    %1489 = vmatprep.subr.bf16.mxu0 0
    %1490 = vmatpush1.bf16.msra.mxu0 0
    %1491 = vmatprep.mubr.bf16.mxu0 0
    %1492 = vmatmul.mubr.bf16.gmra.mrb[0].mxu0 %v1457
    %v1493 = vpop.f32.mrb[0].mxu0
    %v1494 = vadd.f32 0.0, %v1493
    %v1495 = vpop.f32.mrb[0].mxu0
    %v1496 = vpop.f32.mrb[0].mxu0
    %v1497 = vadd.f32 0.0, %v1496
    %v1498 = vpop.f32.mrb[0].mxu0
    %1499 = vdwg.mxu0
    %1500 = vrot.lane.b32.xlu0 %v343, 64
    %v1501 = vpop.permute.xlu0 %1500
    %v1504 = vsel %vm344, %v1452, 0
    %1506 = vmatprep.subr.bf16.mxu0 0
    %1507 = vmatpush1.bf16.msra.mxu0 %v1501
    %1508 = vmatprep.subr.bf16.mxu0 0
    %1509 = vmatpush1.bf16.msra.mxu0 0
    %1510 = vmatprep.subr.bf16.mxu0 0
    %1511 = vmatpush1.bf16.msra.mxu0 0
    %1512 = vmatprep.subr.bf16.mxu0 0
    %1513 = vmatpush1.bf16.msra.mxu0 0
    %1514 = vmatprep.subr.bf16.mxu0 0
    %1515 = vmatpush1.bf16.msra.mxu0 0
    %1516 = vmatprep.subr.bf16.mxu0 0
    %1517 = vmatpush1.bf16.msra.mxu0 0
    %1518 = vmatprep.subr.bf16.mxu0 0
    %1519 = vmatpush1.bf16.msra.mxu0 0
    %1520 = vmatprep.subr.bf16.mxu0 0
    %1521 = vmatpush1.bf16.msra.mxu0 0
    %1522 = vmatprep.subr.bf16.mxu0 0
    %1523 = vmatpush1.bf16.msra.mxu0 0
    %1524 = vmatprep.subr.bf16.mxu0 0
    %1525 = vmatpush1.bf16.msra.mxu0 0
    %1526 = vmatprep.subr.bf16.mxu0 0
    %1527 = vmatpush1.bf16.msra.mxu0 0
    %1528 = vmatprep.subr.bf16.mxu0 0
    %1529 = vmatpush1.bf16.msra.mxu0 0
    %1530 = vmatprep.subr.bf16.mxu0 0
    %1531 = vmatpush1.bf16.msra.mxu0 0
    %1532 = vmatprep.subr.bf16.mxu0 0
    %1533 = vmatpush1.bf16.msra.mxu0 0
    %1534 = vmatprep.subr.bf16.mxu0 0
    %1535 = vmatpush1.bf16.msra.mxu0 0
    %1536 = vmatprep.subr.bf16.mxu0 0
    %1537 = vmatpush1.bf16.msra.mxu0 0
    %1538 = vmatprep.mubr.bf16.mxu0 0
    %1539 = vmatmul.mubr.bf16.gmra.mrb[0].mxu0 %v1504
    %v1540 = vpop.f32.mrb[0].mxu0
    %v1541 = vadd.f32 0.0, %v1540
    %v1542 = vpop.f32.mrb[0].mxu0
    %v1543 = vpop.f32.mrb[0].mxu0
    %v1544 = vadd.f32 0.0, %v1543
    %v1545 = vpop.f32.mrb[0].mxu0
    %1546 = vdwg.mxu0
    %v1547 = vrcp.pop %v1441
    %v1548 = vrcp.pop %v1444
    %v1549 = vrcp.pop %v1447
    %v1550 = vrcp.pop %v1450
    %v1551 = vmul.f32 %v1494, %v1547
    %v1552 = vmul.f32 %v1497, %v1548
    %v1553 = vmul.f32 %v1541, %v1549
    %v1554 = vmul.f32 %v1544, %v1550
    %v1555 = vpack.c.bf16 %v1552, %v1551
    %v1556 = vpack.c.bf16 %v1554, %v1553
    %1557 = vrot.lane.b32.xlu0 %v338, 48
    %v1558 = vpop.permute.xlu0 %1557
    %1559 = vrot.lane.b32.xlu0 %v339, 48
    %v1560 = vpop.permute.xlu0 %1559
    %v1562 = vsel %vm344, %v1558, 0
    %v1565 = vsel %vm344, %v1560, 0
    %1567 = vmatprep.subr.bf16.mxu0 0
    %1568 = vmatpush1.bf16.xpose.msra.mxu0 %v1565
    %1569 = vmatprep.subr.bf16.mxu0 0
    %1570 = vmatpush1.bf16.xpose.msra.mxu0 0
    %1571 = vmatprep.subr.bf16.mxu0 0
    %1572 = vmatpush1.bf16.xpose.msra.mxu0 0
    %1573 = vmatprep.subr.bf16.mxu0 0
    %1574 = vmatpush1.bf16.xpose.msra.mxu0 0
    %1575 = vmatprep.subr.bf16.mxu0 0
    %1576 = vmatpush1.bf16.xpose.msra.mxu0 0
    %1577 = vmatprep.subr.bf16.mxu0 0
    %1578 = vmatpush1.bf16.xpose.msra.mxu0 0
    %1579 = vmatprep.subr.bf16.mxu0 0
    %1580 = vmatpush1.bf16.xpose.msra.mxu0 0
    %1581 = vmatprep.subr.bf16.mxu0 0
    %1582 = vmatpush1.bf16.xpose.msra.mxu0 0
    %1583 = vmatprep.subr.bf16.mxu0 0
    %1584 = vmatpush1.bf16.xpose.msra.mxu0 0
    %1585 = vmatprep.subr.bf16.mxu0 0
    %1586 = vmatpush1.bf16.xpose.msra.mxu0 0
    %1587 = vmatprep.subr.bf16.mxu0 0
    %1588 = vmatpush1.bf16.xpose.msra.mxu0 0
    %1589 = vmatprep.subr.bf16.mxu0 0
    %1590 = vmatpush1.bf16.xpose.msra.mxu0 0
    %1591 = vmatprep.subr.bf16.mxu0 0
    %1592 = vmatpush1.bf16.xpose.msra.mxu0 0
    %1593 = vmatprep.subr.bf16.mxu0 0
    %1594 = vmatpush1.bf16.xpose.msra.mxu0 0
    %1595 = vmatprep.subr.bf16.mxu0 0
    %1596 = vmatpush1.bf16.xpose.msra.mxu0 0
    %1597 = vmatprep.subr.bf16.mxu0 0
    %1598 = vmatpush1.bf16.xpose.msra.mxu0 0
    %1599 = vmatprep.mubr.bf16.mxu0 0
    %1600 = vmatmul.mubr.bf16.gmra.mrb[0].mxu0 %v1562
    %v1601 = vpop.f32.mrb[0].mxu0
    %v1602 = vadd.f32 0.0, %v1601
    %v1603 = vpop.f32.mrb[0].mxu0
    %v1604 = vpop.f32.mrb[0].mxu0
    %v1605 = vadd.f32 0.0, %v1604
    %v1606 = vpop.f32.mrb[0].mxu0
    %1607 = vdwg.mxu0
    %1608 = vrot.lane.b32.xlu0 %v341, 48
    %v1609 = vpop.permute.xlu0 %1608
    %1610 = vrot.lane.b32.xlu0 %v342, 48
    %v1611 = vpop.permute.xlu0 %1610
    %v1613 = vsel %vm344, %v1609, 0
    %v1616 = vsel %vm344, %v1611, 0
    %1618 = vmatprep.subr.bf16.mxu0 0
    %1619 = vmatpush1.bf16.xpose.msra.mxu0 %v1616
    %1620 = vmatprep.subr.bf16.mxu0 0
    %1621 = vmatpush1.bf16.xpose.msra.mxu0 0
    %1622 = vmatprep.subr.bf16.mxu0 0
    %1623 = vmatpush1.bf16.xpose.msra.mxu0 0
    %1624 = vmatprep.subr.bf16.mxu0 0
    %1625 = vmatpush1.bf16.xpose.msra.mxu0 0
    %1626 = vmatprep.subr.bf16.mxu0 0
    %1627 = vmatpush1.bf16.xpose.msra.mxu0 0
    %1628 = vmatprep.subr.bf16.mxu0 0
    %1629 = vmatpush1.bf16.xpose.msra.mxu0 0
    %1630 = vmatprep.subr.bf16.mxu0 0
    %1631 = vmatpush1.bf16.xpose.msra.mxu0 0
    %1632 = vmatprep.subr.bf16.mxu0 0
    %1633 = vmatpush1.bf16.xpose.msra.mxu0 0
    %1634 = vmatprep.subr.bf16.mxu0 0
    %1635 = vmatpush1.bf16.xpose.msra.mxu0 0
    %1636 = vmatprep.subr.bf16.mxu0 0
    %1637 = vmatpush1.bf16.xpose.msra.mxu0 0
    %1638 = vmatprep.subr.bf16.mxu0 0
    %1639 = vmatpush1.bf16.xpose.msra.mxu0 0
    %1640 = vmatprep.subr.bf16.mxu0 0
    %1641 = vmatpush1.bf16.xpose.msra.mxu0 0
    %1642 = vmatprep.subr.bf16.mxu0 0
    %1643 = vmatpush1.bf16.xpose.msra.mxu0 0
    %1644 = vmatprep.subr.bf16.mxu0 0
    %1645 = vmatpush1.bf16.xpose.msra.mxu0 0
    %1646 = vmatprep.subr.bf16.mxu0 0
    %1647 = vmatpush1.bf16.xpose.msra.mxu0 0
    %1648 = vmatprep.subr.bf16.mxu0 0
    %1649 = vmatpush1.bf16.xpose.msra.mxu0 0
    %1650 = vmatprep.mubr.bf16.mxu0 0
    %1651 = vmatmul.mubr.bf16.gmra.mrb[0].mxu0 %v1613
    %v1652 = vpop.f32.mrb[0].mxu0
    %v1653 = vadd.f32 0.0, %v1652
    %v1654 = vpop.f32.mrb[0].mxu0
    %v1655 = vpop.f32.mrb[0].mxu0
    %v1656 = vadd.f32 0.0, %v1655
    %v1657 = vpop.f32.mrb[0].mxu0
    %1658 = vdwg.mxu0
    %v1659 = vsel %vm344, %v1602, -inf
    %1660 = vmax.xlane.f32.xlu0 %v1659
    %v1661 = vpop.xlane.xlu0 %1660
    %v1662 = vsel %vm344, %v1605, -inf
    %1663 = vmax.xlane.f32.xlu0 %v1662
    %v1664 = vpop.xlane.xlu0 %1663
    %v1665 = vsel %vm344, %v1653, -inf
    %1666 = vmax.xlane.f32.xlu0 %v1665
    %v1667 = vpop.xlane.xlu0 %1666
    %v1668 = vsel %vm344, %v1656, -inf
    %1669 = vmax.xlane.f32.xlu0 %v1668
    %v1670 = vpop.xlane.xlu0 %1669
    %v1671 = vsub.f32 %v1602, %v1661
    %v1672 = vsub.f32 %v1605, %v1664
    %v1673 = vsub.f32 %v1653, %v1667
    %v1674 = vsub.f32 %v1656, %v1670
    %v1675 = vmul.f32 %v1671, 1.442695
    %v1676 = vpow.pop %v1675
    %v1677 = vmul.f32 %v1672, 1.442695
    %v1678 = vpow.pop %v1677
    %v1679 = vmul.f32 %v1673, 1.442695
    %v1680 = vpow.pop %v1679
    %v1681 = vmul.f32 %v1674, 1.442695
    %v1682 = vpow.pop %v1681
    %v1683 = vsel %vm344, %v1676, 0.0
    %1684 = vadd.xlane.f32.xlu0 %v1683
    %v1685 = vpop.xlane.xlu0 %1684
    %v1686 = vsel %vm344, %v1678, 0.0
    %1687 = vadd.xlane.f32.xlu0 %v1686
    %v1688 = vpop.xlane.xlu0 %1687
    %v1689 = vsel %vm344, %v1680, 0.0
    %1690 = vadd.xlane.f32.xlu0 %v1689
    %v1691 = vpop.xlane.xlu0 %1690
    %v1692 = vsel %vm344, %v1682, 0.0
    %1693 = vadd.xlane.f32.xlu0 %v1692
    %v1694 = vpop.xlane.xlu0 %1693
    %v1695 = vpack.c.bf16 %v1678, %v1676
    %v1696 = vpack.c.bf16 %v1682, %v1680
    %1697 = vrot.lane.b32.xlu0 %v340, 48
    %v1698 = vpop.permute.xlu0 %1697
    %v1701 = vsel %vm344, %v1695, 0
    %1703 = vmatprep.subr.bf16.mxu0 0
    %1704 = vmatpush1.bf16.msra.mxu0 %v1698
    %1705 = vmatprep.subr.bf16.mxu0 0
    %1706 = vmatpush1.bf16.msra.mxu0 0
    %1707 = vmatprep.subr.bf16.mxu0 0
    %1708 = vmatpush1.bf16.msra.mxu0 0
    %1709 = vmatprep.subr.bf16.mxu0 0
    %1710 = vmatpush1.bf16.msra.mxu0 0
    %1711 = vmatprep.subr.bf16.mxu0 0
    %1712 = vmatpush1.bf16.msra.mxu0 0
    %1713 = vmatprep.subr.bf16.mxu0 0
    %1714 = vmatpush1.bf16.msra.mxu0 0
    %1715 = vmatprep.subr.bf16.mxu0 0
    %1716 = vmatpush1.bf16.msra.mxu0 0
    %1717 = vmatprep.subr.bf16.mxu0 0
    %1718 = vmatpush1.bf16.msra.mxu0 0
    %1719 = vmatprep.subr.bf16.mxu0 0
    %1720 = vmatpush1.bf16.msra.mxu0 0
    %1721 = vmatprep.subr.bf16.mxu0 0
    %1722 = vmatpush1.bf16.msra.mxu0 0
    %1723 = vmatprep.subr.bf16.mxu0 0
    %1724 = vmatpush1.bf16.msra.mxu0 0
    %1725 = vmatprep.subr.bf16.mxu0 0
    %1726 = vmatpush1.bf16.msra.mxu0 0
    %1727 = vmatprep.subr.bf16.mxu0 0
    %1728 = vmatpush1.bf16.msra.mxu0 0
    %1729 = vmatprep.subr.bf16.mxu0 0
    %1730 = vmatpush1.bf16.msra.mxu0 0
    %1731 = vmatprep.subr.bf16.mxu0 0
    %1732 = vmatpush1.bf16.msra.mxu0 0
    %1733 = vmatprep.subr.bf16.mxu0 0
    %1734 = vmatpush1.bf16.msra.mxu0 0
    %1735 = vmatprep.mubr.bf16.mxu0 0
    %1736 = vmatmul.mubr.bf16.gmra.mrb[0].mxu0 %v1701
    %v1737 = vpop.f32.mrb[0].mxu0
    %v1738 = vadd.f32 0.0, %v1737
    %v1739 = vpop.f32.mrb[0].mxu0
    %v1740 = vpop.f32.mrb[0].mxu0
    %v1741 = vadd.f32 0.0, %v1740
    %v1742 = vpop.f32.mrb[0].mxu0
    %1743 = vdwg.mxu0
    %1744 = vrot.lane.b32.xlu0 %v343, 48
    %v1745 = vpop.permute.xlu0 %1744
    %v1748 = vsel %vm344, %v1696, 0
    %1750 = vmatprep.subr.bf16.mxu0 0
    %1751 = vmatpush1.bf16.msra.mxu0 %v1745
    %1752 = vmatprep.subr.bf16.mxu0 0
    %1753 = vmatpush1.bf16.msra.mxu0 0
    %1754 = vmatprep.subr.bf16.mxu0 0
    %1755 = vmatpush1.bf16.msra.mxu0 0
    %1756 = vmatprep.subr.bf16.mxu0 0
    %1757 = vmatpush1.bf16.msra.mxu0 0
    %1758 = vmatprep.subr.bf16.mxu0 0
    %1759 = vmatpush1.bf16.msra.mxu0 0
    %1760 = vmatprep.subr.bf16.mxu0 0
    %1761 = vmatpush1.bf16.msra.mxu0 0
    %1762 = vmatprep.subr.bf16.mxu0 0
    %1763 = vmatpush1.bf16.msra.mxu0 0
    %1764 = vmatprep.subr.bf16.mxu0 0
    %1765 = vmatpush1.bf16.msra.mxu0 0
    %1766 = vmatprep.subr.bf16.mxu0 0
    %1767 = vmatpush1.bf16.msra.mxu0 0
    %1768 = vmatprep.subr.bf16.mxu0 0
    %1769 = vmatpush1.bf16.msra.mxu0 0
    %1770 = vmatprep.subr.bf16.mxu0 0
    %1771 = vmatpush1.bf16.msra.mxu0 0
    %1772 = vmatprep.subr.bf16.mxu0 0
    %1773 = vmatpush1.bf16.msra.mxu0 0
    %1774 = vmatprep.subr.bf16.mxu0 0
    %1775 = vmatpush1.bf16.msra.mxu0 0
    %1776 = vmatprep.subr.bf16.mxu0 0
    %1777 = vmatpush1.bf16.msra.mxu0 0
    %1778 = vmatprep.subr.bf16.mxu0 0
    %1779 = vmatpush1.bf16.msra.mxu0 0
    %1780 = vmatprep.subr.bf16.mxu0 0
    %1781 = vmatpush1.bf16.msra.mxu0 0
    %1782 = vmatprep.mubr.bf16.mxu0 0
    %1783 = vmatmul.mubr.bf16.gmra.mrb[0].mxu0 %v1748
    %v1784 = vpop.f32.mrb[0].mxu0
    %v1785 = vadd.f32 0.0, %v1784
    %v1786 = vpop.f32.mrb[0].mxu0
    %v1787 = vpop.f32.mrb[0].mxu0
    %v1788 = vadd.f32 0.0, %v1787
    %v1789 = vpop.f32.mrb[0].mxu0
    %1790 = vdwg.mxu0
    %v1791 = vrcp.pop %v1685
    %v1792 = vrcp.pop %v1688
    %v1793 = vrcp.pop %v1691
    %v1794 = vrcp.pop %v1694
    %v1795 = vmul.f32 %v1738, %v1791
    %v1796 = vmul.f32 %v1741, %v1792
    %v1797 = vmul.f32 %v1785, %v1793
    %v1798 = vmul.f32 %v1788, %v1794
    %v1799 = vpack.c.bf16 %v1796, %v1795
    %v1800 = vpack.c.bf16 %v1798, %v1797
    %1801 = vrot.lane.b32.xlu0 %v338, 32
    %v1802 = vpop.permute.xlu0 %1801
    %1803 = vrot.lane.b32.xlu0 %v339, 32
    %v1804 = vpop.permute.xlu0 %1803
    %v1806 = vsel %vm344, %v1802, 0
    %v1809 = vsel %vm344, %v1804, 0
    %1811 = vmatprep.subr.bf16.mxu0 0
    %1812 = vmatpush1.bf16.xpose.msra.mxu0 %v1809
    %1813 = vmatprep.subr.bf16.mxu0 0
    %1814 = vmatpush1.bf16.xpose.msra.mxu0 0
    %1815 = vmatprep.subr.bf16.mxu0 0
    %1816 = vmatpush1.bf16.xpose.msra.mxu0 0
    %1817 = vmatprep.subr.bf16.mxu0 0
    %1818 = vmatpush1.bf16.xpose.msra.mxu0 0
    %1819 = vmatprep.subr.bf16.mxu0 0
    %1820 = vmatpush1.bf16.xpose.msra.mxu0 0
    %1821 = vmatprep.subr.bf16.mxu0 0
    %1822 = vmatpush1.bf16.xpose.msra.mxu0 0
    %1823 = vmatprep.subr.bf16.mxu0 0
    %1824 = vmatpush1.bf16.xpose.msra.mxu0 0
    %1825 = vmatprep.subr.bf16.mxu0 0
    %1826 = vmatpush1.bf16.xpose.msra.mxu0 0
    %1827 = vmatprep.subr.bf16.mxu0 0
    %1828 = vmatpush1.bf16.xpose.msra.mxu0 0
    %1829 = vmatprep.subr.bf16.mxu0 0
    %1830 = vmatpush1.bf16.xpose.msra.mxu0 0
    %1831 = vmatprep.subr.bf16.mxu0 0
    %1832 = vmatpush1.bf16.xpose.msra.mxu0 0
    %1833 = vmatprep.subr.bf16.mxu0 0
    %1834 = vmatpush1.bf16.xpose.msra.mxu0 0
    %1835 = vmatprep.subr.bf16.mxu0 0
    %1836 = vmatpush1.bf16.xpose.msra.mxu0 0
    %1837 = vmatprep.subr.bf16.mxu0 0
    %1838 = vmatpush1.bf16.xpose.msra.mxu0 0
    %1839 = vmatprep.subr.bf16.mxu0 0
    %1840 = vmatpush1.bf16.xpose.msra.mxu0 0
    %1841 = vmatprep.subr.bf16.mxu0 0
    %1842 = vmatpush1.bf16.xpose.msra.mxu0 0
    %1843 = vmatprep.mubr.bf16.mxu0 0
    %1844 = vmatmul.mubr.bf16.gmra.mrb[0].mxu0 %v1806
    %v1845 = vpop.f32.mrb[0].mxu0
    %v1846 = vadd.f32 0.0, %v1845
    %v1847 = vpop.f32.mrb[0].mxu0
    %v1848 = vpop.f32.mrb[0].mxu0
    %v1849 = vadd.f32 0.0, %v1848
    %v1850 = vpop.f32.mrb[0].mxu0
    %1851 = vdwg.mxu0
    %1852 = vrot.lane.b32.xlu0 %v341, 32
    %v1853 = vpop.permute.xlu0 %1852
    %1854 = vrot.lane.b32.xlu0 %v342, 32
    %v1855 = vpop.permute.xlu0 %1854
    %v1857 = vsel %vm344, %v1853, 0
    %v1860 = vsel %vm344, %v1855, 0
    %1862 = vmatprep.subr.bf16.mxu0 0
    %1863 = vmatpush1.bf16.xpose.msra.mxu0 %v1860
    %1864 = vmatprep.subr.bf16.mxu0 0
    %1865 = vmatpush1.bf16.xpose.msra.mxu0 0
    %1866 = vmatprep.subr.bf16.mxu0 0
    %1867 = vmatpush1.bf16.xpose.msra.mxu0 0
    %1868 = vmatprep.subr.bf16.mxu0 0
    %1869 = vmatpush1.bf16.xpose.msra.mxu0 0
    %1870 = vmatprep.subr.bf16.mxu0 0
    %1871 = vmatpush1.bf16.xpose.msra.mxu0 0
    %1872 = vmatprep.subr.bf16.mxu0 0
    %1873 = vmatpush1.bf16.xpose.msra.mxu0 0
    %1874 = vmatprep.subr.bf16.mxu0 0
    %1875 = vmatpush1.bf16.xpose.msra.mxu0 0
    %1876 = vmatprep.subr.bf16.mxu0 0
    %1877 = vmatpush1.bf16.xpose.msra.mxu0 0
    %1878 = vmatprep.subr.bf16.mxu0 0
    %1879 = vmatpush1.bf16.xpose.msra.mxu0 0
    %1880 = vmatprep.subr.bf16.mxu0 0
    %1881 = vmatpush1.bf16.xpose.msra.mxu0 0
    %1882 = vmatprep.subr.bf16.mxu0 0
    %1883 = vmatpush1.bf16.xpose.msra.mxu0 0
    %1884 = vmatprep.subr.bf16.mxu0 0
    %1885 = vmatpush1.bf16.xpose.msra.mxu0 0
    %1886 = vmatprep.subr.bf16.mxu0 0
    %1887 = vmatpush1.bf16.xpose.msra.mxu0 0
    %1888 = vmatprep.subr.bf16.mxu0 0
    %1889 = vmatpush1.bf16.xpose.msra.mxu0 0
    %1890 = vmatprep.subr.bf16.mxu0 0
    %1891 = vmatpush1.bf16.xpose.msra.mxu0 0
    %1892 = vmatprep.subr.bf16.mxu0 0
    %1893 = vmatpush1.bf16.xpose.msra.mxu0 0
    %1894 = vmatprep.mubr.bf16.mxu0 0
    %1895 = vmatmul.mubr.bf16.gmra.mrb[0].mxu0 %v1857
    %v1896 = vpop.f32.mrb[0].mxu0
    %v1897 = vadd.f32 0.0, %v1896
    %v1898 = vpop.f32.mrb[0].mxu0
    %v1899 = vpop.f32.mrb[0].mxu0
    %v1900 = vadd.f32 0.0, %v1899
    %v1901 = vpop.f32.mrb[0].mxu0
    %1902 = vdwg.mxu0
    %v1903 = vsel %vm344, %v1846, -inf
    %1904 = vmax.xlane.f32.xlu0 %v1903
    %v1905 = vpop.xlane.xlu0 %1904
    %v1906 = vsel %vm344, %v1849, -inf
    %1907 = vmax.xlane.f32.xlu0 %v1906
    %v1908 = vpop.xlane.xlu0 %1907
    %v1909 = vsel %vm344, %v1897, -inf
    %1910 = vmax.xlane.f32.xlu0 %v1909
    %v1911 = vpop.xlane.xlu0 %1910
    %v1912 = vsel %vm344, %v1900, -inf
    %1913 = vmax.xlane.f32.xlu0 %v1912
    %v1914 = vpop.xlane.xlu0 %1913
    %v1915 = vsub.f32 %v1846, %v1905
    %v1916 = vsub.f32 %v1849, %v1908
    %v1917 = vsub.f32 %v1897, %v1911
    %v1918 = vsub.f32 %v1900, %v1914
    %v1919 = vmul.f32 %v1915, 1.442695
    %v1920 = vpow.pop %v1919
    %v1921 = vmul.f32 %v1916, 1.442695
    %v1922 = vpow.pop %v1921
    %v1923 = vmul.f32 %v1917, 1.442695
    %v1924 = vpow.pop %v1923
    %v1925 = vmul.f32 %v1918, 1.442695
    %v1926 = vpow.pop %v1925
    %v1927 = vsel %vm344, %v1920, 0.0
    %1928 = vadd.xlane.f32.xlu0 %v1927
    %v1929 = vpop.xlane.xlu0 %1928
    %v1930 = vsel %vm344, %v1922, 0.0
    %1931 = vadd.xlane.f32.xlu0 %v1930
    %v1932 = vpop.xlane.xlu0 %1931
    %v1933 = vsel %vm344, %v1924, 0.0
    %1934 = vadd.xlane.f32.xlu0 %v1933
    %v1935 = vpop.xlane.xlu0 %1934
    %v1936 = vsel %vm344, %v1926, 0.0
    %1937 = vadd.xlane.f32.xlu0 %v1936
    %v1938 = vpop.xlane.xlu0 %1937
    %v1939 = vpack.c.bf16 %v1922, %v1920
    %v1940 = vpack.c.bf16 %v1926, %v1924
    %1941 = vrot.lane.b32.xlu0 %v340, 32
    %v1942 = vpop.permute.xlu0 %1941
    %v1945 = vsel %vm344, %v1939, 0
    %1947 = vmatprep.subr.bf16.mxu0 0
    %1948 = vmatpush1.bf16.msra.mxu0 %v1942
    %1949 = vmatprep.subr.bf16.mxu0 0
    %1950 = vmatpush1.bf16.msra.mxu0 0
    %1951 = vmatprep.subr.bf16.mxu0 0
    %1952 = vmatpush1.bf16.msra.mxu0 0
    %1953 = vmatprep.subr.bf16.mxu0 0
    %1954 = vmatpush1.bf16.msra.mxu0 0
    %1955 = vmatprep.subr.bf16.mxu0 0
    %1956 = vmatpush1.bf16.msra.mxu0 0
    %1957 = vmatprep.subr.bf16.mxu0 0
    %1958 = vmatpush1.bf16.msra.mxu0 0
    %1959 = vmatprep.subr.bf16.mxu0 0
    %1960 = vmatpush1.bf16.msra.mxu0 0
    %1961 = vmatprep.subr.bf16.mxu0 0
    %1962 = vmatpush1.bf16.msra.mxu0 0
    %1963 = vmatprep.subr.bf16.mxu0 0
    %1964 = vmatpush1.bf16.msra.mxu0 0
    %1965 = vmatprep.subr.bf16.mxu0 0
    %1966 = vmatpush1.bf16.msra.mxu0 0
    %1967 = vmatprep.subr.bf16.mxu0 0
    %1968 = vmatpush1.bf16.msra.mxu0 0
    %1969 = vmatprep.subr.bf16.mxu0 0
    %1970 = vmatpush1.bf16.msra.mxu0 0
    %1971 = vmatprep.subr.bf16.mxu0 0
    %1972 = vmatpush1.bf16.msra.mxu0 0
    %1973 = vmatprep.subr.bf16.mxu0 0
    %1974 = vmatpush1.bf16.msra.mxu0 0
    %1975 = vmatprep.subr.bf16.mxu0 0
    %1976 = vmatpush1.bf16.msra.mxu0 0
    %1977 = vmatprep.subr.bf16.mxu0 0
    %1978 = vmatpush1.bf16.msra.mxu0 0
    %1979 = vmatprep.mubr.bf16.mxu0 0
    %1980 = vmatmul.mubr.bf16.gmra.mrb[0].mxu0 %v1945
    %v1981 = vpop.f32.mrb[0].mxu0
    %v1982 = vadd.f32 0.0, %v1981
    %v1983 = vpop.f32.mrb[0].mxu0
    %v1984 = vpop.f32.mrb[0].mxu0
    %v1985 = vadd.f32 0.0, %v1984
    %v1986 = vpop.f32.mrb[0].mxu0
    %1987 = vdwg.mxu0
    %1988 = vrot.lane.b32.xlu0 %v343, 32
    %v1989 = vpop.permute.xlu0 %1988
    %v1992 = vsel %vm344, %v1940, 0
    %1994 = vmatprep.subr.bf16.mxu0 0
    %1995 = vmatpush1.bf16.msra.mxu0 %v1989
    %1996 = vmatprep.subr.bf16.mxu0 0
    %1997 = vmatpush1.bf16.msra.mxu0 0
    %1998 = vmatprep.subr.bf16.mxu0 0
    %1999 = vmatpush1.bf16.msra.mxu0 0
    %2000 = vmatprep.subr.bf16.mxu0 0
    %2001 = vmatpush1.bf16.msra.mxu0 0
    %2002 = vmatprep.subr.bf16.mxu0 0
    %2003 = vmatpush1.bf16.msra.mxu0 0
    %2004 = vmatprep.subr.bf16.mxu0 0
    %2005 = vmatpush1.bf16.msra.mxu0 0
    %2006 = vmatprep.subr.bf16.mxu0 0
    %2007 = vmatpush1.bf16.msra.mxu0 0
    %2008 = vmatprep.subr.bf16.mxu0 0
    %2009 = vmatpush1.bf16.msra.mxu0 0
    %2010 = vmatprep.subr.bf16.mxu0 0
    %2011 = vmatpush1.bf16.msra.mxu0 0
    %2012 = vmatprep.subr.bf16.mxu0 0
    %2013 = vmatpush1.bf16.msra.mxu0 0
    %2014 = vmatprep.subr.bf16.mxu0 0
    %2015 = vmatpush1.bf16.msra.mxu0 0
    %2016 = vmatprep.subr.bf16.mxu0 0
    %2017 = vmatpush1.bf16.msra.mxu0 0
    %2018 = vmatprep.subr.bf16.mxu0 0
    %2019 = vmatpush1.bf16.msra.mxu0 0
    %2020 = vmatprep.subr.bf16.mxu0 0
    %2021 = vmatpush1.bf16.msra.mxu0 0
    %2022 = vmatprep.subr.bf16.mxu0 0
    %2023 = vmatpush1.bf16.msra.mxu0 0
    %2024 = vmatprep.subr.bf16.mxu0 0
    %2025 = vmatpush1.bf16.msra.mxu0 0
    %2026 = vmatprep.mubr.bf16.mxu0 0
    %2027 = vmatmul.mubr.bf16.gmra.mrb[0].mxu0 %v1992
    %v2028 = vpop.f32.mrb[0].mxu0
    %v2029 = vadd.f32 0.0, %v2028
    %v2030 = vpop.f32.mrb[0].mxu0
    %v2031 = vpop.f32.mrb[0].mxu0
    %v2032 = vadd.f32 0.0, %v2031
    %v2033 = vpop.f32.mrb[0].mxu0
    %2034 = vdwg.mxu0
    %v2035 = vrcp.pop %v1929
    %v2036 = vrcp.pop %v1932
    %v2037 = vrcp.pop %v1935
    %v2038 = vrcp.pop %v1938
    %v2039 = vmul.f32 %v1982, %v2035
    %v2040 = vmul.f32 %v1985, %v2036
    %v2041 = vmul.f32 %v2029, %v2037
    %v2042 = vmul.f32 %v2032, %v2038
    %v2043 = vpack.c.bf16 %v2040, %v2039
    %v2044 = vpack.c.bf16 %v2042, %v2041
    %2045 = vrot.lane.b32.xlu0 %v338, 16
    %v2046 = vpop.permute.xlu0 %2045
    %2047 = vrot.lane.b32.xlu0 %v339, 16
    %v2048 = vpop.permute.xlu0 %2047
    %v2050 = vsel %vm344, %v2046, 0
    %v2053 = vsel %vm344, %v2048, 0
    %2055 = vmatprep.subr.bf16.mxu0 0
    %2056 = vmatpush1.bf16.xpose.msra.mxu0 %v2053
    %2057 = vmatprep.subr.bf16.mxu0 0
    %2058 = vmatpush1.bf16.xpose.msra.mxu0 0
    %2059 = vmatprep.subr.bf16.mxu0 0
    %2060 = vmatpush1.bf16.xpose.msra.mxu0 0
    %2061 = vmatprep.subr.bf16.mxu0 0
    %2062 = vmatpush1.bf16.xpose.msra.mxu0 0
    %2063 = vmatprep.subr.bf16.mxu0 0
    %2064 = vmatpush1.bf16.xpose.msra.mxu0 0
    %2065 = vmatprep.subr.bf16.mxu0 0
    %2066 = vmatpush1.bf16.xpose.msra.mxu0 0
    %2067 = vmatprep.subr.bf16.mxu0 0
    %2068 = vmatpush1.bf16.xpose.msra.mxu0 0
    %2069 = vmatprep.subr.bf16.mxu0 0
    %2070 = vmatpush1.bf16.xpose.msra.mxu0 0
    %2071 = vmatprep.subr.bf16.mxu0 0
    %2072 = vmatpush1.bf16.xpose.msra.mxu0 0
    %2073 = vmatprep.subr.bf16.mxu0 0
    %2074 = vmatpush1.bf16.xpose.msra.mxu0 0
    %2075 = vmatprep.subr.bf16.mxu0 0
    %2076 = vmatpush1.bf16.xpose.msra.mxu0 0
    %2077 = vmatprep.subr.bf16.mxu0 0
    %2078 = vmatpush1.bf16.xpose.msra.mxu0 0
    %2079 = vmatprep.subr.bf16.mxu0 0
    %2080 = vmatpush1.bf16.xpose.msra.mxu0 0
    %2081 = vmatprep.subr.bf16.mxu0 0
    %2082 = vmatpush1.bf16.xpose.msra.mxu0 0
    %2083 = vmatprep.subr.bf16.mxu0 0
    %2084 = vmatpush1.bf16.xpose.msra.mxu0 0
    %2085 = vmatprep.subr.bf16.mxu0 0
    %2086 = vmatpush1.bf16.xpose.msra.mxu0 0
    %2087 = vmatprep.mubr.bf16.mxu0 0
    %2088 = vmatmul.mubr.bf16.gmra.mrb[0].mxu0 %v2050
    %v2089 = vpop.f32.mrb[0].mxu0
    %v2090 = vadd.f32 0.0, %v2089
    %v2091 = vpop.f32.mrb[0].mxu0
    %v2092 = vpop.f32.mrb[0].mxu0
    %v2093 = vadd.f32 0.0, %v2092
    %v2094 = vpop.f32.mrb[0].mxu0
    %2095 = vdwg.mxu0
    %2096 = vrot.lane.b32.xlu0 %v341, 16
    %v2097 = vpop.permute.xlu0 %2096
    %2098 = vrot.lane.b32.xlu0 %v342, 16
    %v2099 = vpop.permute.xlu0 %2098
    %v2101 = vsel %vm344, %v2097, 0
    %v2104 = vsel %vm344, %v2099, 0
    %2106 = vmatprep.subr.bf16.mxu0 0
    %2107 = vmatpush1.bf16.xpose.msra.mxu0 %v2104
    %2108 = vmatprep.subr.bf16.mxu0 0
    %2109 = vmatpush1.bf16.xpose.msra.mxu0 0
    %2110 = vmatprep.subr.bf16.mxu0 0
    %2111 = vmatpush1.bf16.xpose.msra.mxu0 0
    %2112 = vmatprep.subr.bf16.mxu0 0
    %2113 = vmatpush1.bf16.xpose.msra.mxu0 0
    %2114 = vmatprep.subr.bf16.mxu0 0
    %2115 = vmatpush1.bf16.xpose.msra.mxu0 0
    %2116 = vmatprep.subr.bf16.mxu0 0
    %2117 = vmatpush1.bf16.xpose.msra.mxu0 0
    %2118 = vmatprep.subr.bf16.mxu0 0
    %2119 = vmatpush1.bf16.xpose.msra.mxu0 0
    %2120 = vmatprep.subr.bf16.mxu0 0
    %2121 = vmatpush1.bf16.xpose.msra.mxu0 0
    %2122 = vmatprep.subr.bf16.mxu0 0
    %2123 = vmatpush1.bf16.xpose.msra.mxu0 0
    %2124 = vmatprep.subr.bf16.mxu0 0
    %2125 = vmatpush1.bf16.xpose.msra.mxu0 0
    %2126 = vmatprep.subr.bf16.mxu0 0
    %2127 = vmatpush1.bf16.xpose.msra.mxu0 0
    %2128 = vmatprep.subr.bf16.mxu0 0
    %2129 = vmatpush1.bf16.xpose.msra.mxu0 0
    %2130 = vmatprep.subr.bf16.mxu0 0
    %2131 = vmatpush1.bf16.xpose.msra.mxu0 0
    %2132 = vmatprep.subr.bf16.mxu0 0
    %2133 = vmatpush1.bf16.xpose.msra.mxu0 0
    %2134 = vmatprep.subr.bf16.mxu0 0
    %2135 = vmatpush1.bf16.xpose.msra.mxu0 0
    %2136 = vmatprep.subr.bf16.mxu0 0
    %2137 = vmatpush1.bf16.xpose.msra.mxu0 0
    %2138 = vmatprep.mubr.bf16.mxu0 0
    %2139 = vmatmul.mubr.bf16.gmra.mrb[0].mxu0 %v2101
    %v2140 = vpop.f32.mrb[0].mxu0
    %v2141 = vadd.f32 0.0, %v2140
    %v2142 = vpop.f32.mrb[0].mxu0
    %v2143 = vpop.f32.mrb[0].mxu0
    %v2144 = vadd.f32 0.0, %v2143
    %v2145 = vpop.f32.mrb[0].mxu0
    %2146 = vdwg.mxu0
    %v2147 = vsel %vm344, %v2090, -inf
    %2148 = vmax.xlane.f32.xlu0 %v2147
    %v2149 = vpop.xlane.xlu0 %2148
    %v2150 = vsel %vm344, %v2093, -inf
    %2151 = vmax.xlane.f32.xlu0 %v2150
    %v2152 = vpop.xlane.xlu0 %2151
    %v2153 = vsel %vm344, %v2141, -inf
    %2154 = vmax.xlane.f32.xlu0 %v2153
    %v2155 = vpop.xlane.xlu0 %2154
    %v2156 = vsel %vm344, %v2144, -inf
    %2157 = vmax.xlane.f32.xlu0 %v2156
    %v2158 = vpop.xlane.xlu0 %2157
    %v2159 = vsub.f32 %v2090, %v2149
    %v2160 = vsub.f32 %v2093, %v2152
    %v2161 = vsub.f32 %v2141, %v2155
    %v2162 = vsub.f32 %v2144, %v2158
    %v2163 = vmul.f32 %v2159, 1.442695
    %v2164 = vpow.pop %v2163
    %v2165 = vmul.f32 %v2160, 1.442695
    %v2166 = vpow.pop %v2165
    %v2167 = vmul.f32 %v2161, 1.442695
    %v2168 = vpow.pop %v2167
    %v2169 = vmul.f32 %v2162, 1.442695
    %v2170 = vpow.pop %v2169
    %v2171 = vsel %vm344, %v2164, 0.0
    %2172 = vadd.xlane.f32.xlu0 %v2171
    %v2173 = vpop.xlane.xlu0 %2172
    %v2174 = vsel %vm344, %v2166, 0.0
    %2175 = vadd.xlane.f32.xlu0 %v2174
    %v2176 = vpop.xlane.xlu0 %2175
    %v2177 = vsel %vm344, %v2168, 0.0
    %2178 = vadd.xlane.f32.xlu0 %v2177
    %v2179 = vpop.xlane.xlu0 %2178
    %v2180 = vsel %vm344, %v2170, 0.0
    %2181 = vadd.xlane.f32.xlu0 %v2180
    %v2182 = vpop.xlane.xlu0 %2181
    %v2183 = vpack.c.bf16 %v2166, %v2164
    %v2184 = vpack.c.bf16 %v2170, %v2168
    %2185 = vrot.lane.b32.xlu0 %v340, 16
    %v2186 = vpop.permute.xlu0 %2185
    %v2189 = vsel %vm344, %v2183, 0
    %2191 = vmatprep.subr.bf16.mxu0 0
    %2192 = vmatpush1.bf16.msra.mxu0 %v2186
    %2193 = vmatprep.subr.bf16.mxu0 0
    %2194 = vmatpush1.bf16.msra.mxu0 0
    %2195 = vmatprep.subr.bf16.mxu0 0
    %2196 = vmatpush1.bf16.msra.mxu0 0
    %2197 = vmatprep.subr.bf16.mxu0 0
    %2198 = vmatpush1.bf16.msra.mxu0 0
    %2199 = vmatprep.subr.bf16.mxu0 0
    %2200 = vmatpush1.bf16.msra.mxu0 0
    %2201 = vmatprep.subr.bf16.mxu0 0
    %2202 = vmatpush1.bf16.msra.mxu0 0
    %2203 = vmatprep.subr.bf16.mxu0 0
    %2204 = vmatpush1.bf16.msra.mxu0 0
    %2205 = vmatprep.subr.bf16.mxu0 0
    %2206 = vmatpush1.bf16.msra.mxu0 0
    %2207 = vmatprep.subr.bf16.mxu0 0
    %2208 = vmatpush1.bf16.msra.mxu0 0
    %2209 = vmatprep.subr.bf16.mxu0 0
    %2210 = vmatpush1.bf16.msra.mxu0 0
    %2211 = vmatprep.subr.bf16.mxu0 0
    %2212 = vmatpush1.bf16.msra.mxu0 0
    %2213 = vmatprep.subr.bf16.mxu0 0
    %2214 = vmatpush1.bf16.msra.mxu0 0
    %2215 = vmatprep.subr.bf16.mxu0 0
    %2216 = vmatpush1.bf16.msra.mxu0 0
    %2217 = vmatprep.subr.bf16.mxu0 0
    %2218 = vmatpush1.bf16.msra.mxu0 0
    %2219 = vmatprep.subr.bf16.mxu0 0
    %2220 = vmatpush1.bf16.msra.mxu0 0
    %2221 = vmatprep.subr.bf16.mxu0 0
    %2222 = vmatpush1.bf16.msra.mxu0 0
    %2223 = vmatprep.mubr.bf16.mxu0 0
    %2224 = vmatmul.mubr.bf16.gmra.mrb[0].mxu0 %v2189
    %v2225 = vpop.f32.mrb[0].mxu0
    %v2226 = vadd.f32 0.0, %v2225
    %v2227 = vpop.f32.mrb[0].mxu0
    %v2228 = vpop.f32.mrb[0].mxu0
    %v2229 = vadd.f32 0.0, %v2228
    %v2230 = vpop.f32.mrb[0].mxu0
    %2231 = vdwg.mxu0
    %2232 = vrot.lane.b32.xlu0 %v343, 16
    %v2233 = vpop.permute.xlu0 %2232
    %v2236 = vsel %vm344, %v2184, 0
    %2238 = vmatprep.subr.bf16.mxu0 0
    %2239 = vmatpush1.bf16.msra.mxu0 %v2233
    %2240 = vmatprep.subr.bf16.mxu0 0
    %2241 = vmatpush1.bf16.msra.mxu0 0
    %2242 = vmatprep.subr.bf16.mxu0 0
    %2243 = vmatpush1.bf16.msra.mxu0 0
    %2244 = vmatprep.subr.bf16.mxu0 0
    %2245 = vmatpush1.bf16.msra.mxu0 0
    %2246 = vmatprep.subr.bf16.mxu0 0
    %2247 = vmatpush1.bf16.msra.mxu0 0
    %2248 = vmatprep.subr.bf16.mxu0 0
    %2249 = vmatpush1.bf16.msra.mxu0 0
    %2250 = vmatprep.subr.bf16.mxu0 0
    %2251 = vmatpush1.bf16.msra.mxu0 0
    %2252 = vmatprep.subr.bf16.mxu0 0
    %2253 = vmatpush1.bf16.msra.mxu0 0
    %2254 = vmatprep.subr.bf16.mxu0 0
    %2255 = vmatpush1.bf16.msra.mxu0 0
    %2256 = vmatprep.subr.bf16.mxu0 0
    %2257 = vmatpush1.bf16.msra.mxu0 0
    %2258 = vmatprep.subr.bf16.mxu0 0
    %2259 = vmatpush1.bf16.msra.mxu0 0
    %2260 = vmatprep.subr.bf16.mxu0 0
    %2261 = vmatpush1.bf16.msra.mxu0 0
    %2262 = vmatprep.subr.bf16.mxu0 0
    %2263 = vmatpush1.bf16.msra.mxu0 0
    %2264 = vmatprep.subr.bf16.mxu0 0
    %2265 = vmatpush1.bf16.msra.mxu0 0
    %2266 = vmatprep.subr.bf16.mxu0 0
    %2267 = vmatpush1.bf16.msra.mxu0 0
    %2268 = vmatprep.subr.bf16.mxu0 0
    %2269 = vmatpush1.bf16.msra.mxu0 0
    %2270 = vmatprep.mubr.bf16.mxu0 0
    %2271 = vmatmul.mubr.bf16.gmra.mrb[0].mxu0 %v2236
    %v2272 = vpop.f32.mrb[0].mxu0
    %v2273 = vadd.f32 0.0, %v2272
    %v2274 = vpop.f32.mrb[0].mxu0
    %v2275 = vpop.f32.mrb[0].mxu0
    %v2276 = vadd.f32 0.0, %v2275
    %v2277 = vpop.f32.mrb[0].mxu0
    %2278 = vdwg.mxu0
    %v2279 = vrcp.pop %v2173
    %v2280 = vrcp.pop %v2176
    %v2281 = vrcp.pop %v2179
    %v2282 = vrcp.pop %v2182
    %v2283 = vmul.f32 %v2226, %v2279
    %v2284 = vmul.f32 %v2229, %v2280
    %v2285 = vmul.f32 %v2273, %v2281
    %v2286 = vmul.f32 %v2276, %v2282
    %v2287 = vpack.c.bf16 %v2284, %v2283
    %v2288 = vpack.c.bf16 %v2286, %v2285
    %2291 = vrot.lane.b32.xlu0 %v823, 16
    %v2292 = vpop.permute.xlu0 %2291
    %2293 = vrot.lane.b32.xlu0 %v824, 16
    %v2294 = vpop.permute.xlu0 %2293
    %2297 = vrot.lane.b32.xlu0 %v1067, 32
    %v2298 = vpop.permute.xlu0 %2297
    %2299 = vrot.lane.b32.xlu0 %v1068, 32
    %v2300 = vpop.permute.xlu0 %2299
    %2303 = vrot.lane.b32.xlu0 %v1311, 48
    %v2304 = vpop.permute.xlu0 %2303
    %2305 = vrot.lane.b32.xlu0 %v1312, 48
    %v2306 = vpop.permute.xlu0 %2305
    %2309 = vrot.lane.b32.xlu0 %v1555, 64
    %v2310 = vpop.permute.xlu0 %2309
    %2311 = vrot.lane.b32.xlu0 %v1556, 64
    %v2312 = vpop.permute.xlu0 %2311
    %2315 = vrot.lane.b32.xlu0 %v1799, 80
    %v2316 = vpop.permute.xlu0 %2315
    %2317 = vrot.lane.b32.xlu0 %v1800, 80
    %v2318 = vpop.permute.xlu0 %2317
    %2321 = vrot.lane.b32.xlu0 %v2043, 96
    %v2322 = vpop.permute.xlu0 %2321
    %2323 = vrot.lane.b32.xlu0 %v2044, 96
    %v2324 = vpop.permute.xlu0 %2323
    %2327 = vrot.lane.b32.xlu0 %v2287, 112
    %v2328 = vpop.permute.xlu0 %2327
    %2329 = vrot.lane.b32.xlu0 %v2288, 112
    %v2330 = vpop.permute.xlu0 %2329
    %v2333 = vsel %vm344, %v573, %v2292
    %v2336 = vsel %vm344, %v574, %v2294
    %vm2337 = vcmask 261120
    %v2339 = vsel %vm2337, %v2333, %v2298
    %v2341 = vsel %vm2337, %v2336, %v2300
    %vm2342 = vcmask 392192
    %v2344 = vsel %vm2342, %v2339, %v2304
    %v2346 = vsel %vm2342, %v2341, %v2306
    %vm2347 = vcmask 523264
    %v2349 = vsel %vm2347, %v2344, %v2310
    %v2351 = vsel %vm2347, %v2346, %v2312
    %vm2352 = vcmask 654336
    %v2354 = vsel %vm2352, %v2349, %v2316
    %v2356 = vsel %vm2352, %v2351, %v2318
    %vm2357 = vcmask 785408
    %v2359 = vsel %vm2357, %v2354, %v2322
    %v2361 = vsel %vm2357, %v2356, %v2324
    %vm2362 = vcmask 916480
    %v2364 = vsel %vm2362, %v2359, %v2328
    %v2367 = vsel %vm2362, %v2361, %v2330
    %v2369 = vld [vmem:[#allocation7] sm:$0xf]
    %v2370 = vld [vmem:[#allocation7 + $0x4] sm:$0xf]
    %v2371 = vld [vmem:[#allocation7 + $0x8] sm:$0xf]
    %v2372 = vld [vmem:[#allocation7 + $0xc] sm:$0xf]
    %v2373 = vld [vmem:[#allocation7 + $0x10] sm:$0xf]
    %v2374 = vld [vmem:[#allocation7 + $0x14] sm:$0xf]
    %v2375 = vld [vmem:[#allocation7 + $0x18] sm:$0xf]
    %v2376 = vld [vmem:[#allocation7 + $0x1c] sm:$0xf]
    %v2377 = vld [vmem:[#allocation7 + $0x20] sm:$0xf]
    %v2378 = vld [vmem:[#allocation7 + $0x24] sm:$0xf]
    %v2379 = vld [vmem:[#allocation7 + $0x28] sm:$0xf]
    %v2380 = vld [vmem:[#allocation7 + $0x2c] sm:$0xf]
    %v2381 = vld [vmem:[#allocation7 + $0x30] sm:$0xf]
    %v2382 = vld [vmem:[#allocation7 + $0x34] sm:$0xf]
    %v2383 = vld [vmem:[#allocation7 + $0x38] sm:$0xf]
    %v2384 = vld [vmem:[#allocation7 + $0x3c] sm:$0xf]
    %v2385 = vld [vmem:[%s3] sm:$0x1]
    %v2387 = vlaneseq
    %v2388 = vshrl.u32 %v2387, 7
    %v2389 = vsub.s32 0, %v2388
    %v2390 = vrot.slane %v2385, %v2389
    %v2408 = vunpack.c.l.b16 %v2369
    %v2409 = vunpack.c.l.b16 %v2370
    %v2410 = vunpack.c.l.b16 %v2371
    %v2411 = vunpack.c.l.b16 %v2372
    %v2412 = vunpack.c.l.b16 %v2373
    %v2413 = vunpack.c.l.b16 %v2374
    %v2414 = vunpack.c.l.b16 %v2375
    %v2415 = vunpack.c.l.b16 %v2376
    %v2416 = vunpack.c.l.b16 %v2377
    %v2417 = vunpack.c.l.b16 %v2378
    %v2418 = vunpack.c.l.b16 %v2379
    %v2419 = vunpack.c.l.b16 %v2380
    %v2420 = vunpack.c.l.b16 %v2381
    %v2421 = vunpack.c.l.b16 %v2382
    %v2422 = vunpack.c.l.b16 %v2383
    %v2423 = vunpack.c.l.b16 %v2384
    %v2424 = vpack.c.b16 %v2409, %v2408
    %v2425 = vpack.c.b16 %v2411, %v2410
    %v2426 = vpack.c.b16 %v2413, %v2412
    %v2427 = vpack.c.b16 %v2415, %v2414
    %v2428 = vpack.c.b16 %v2417, %v2416
    %v2429 = vpack.c.b16 %v2419, %v2418
    %v2430 = vpack.c.b16 %v2421, %v2420
    %v2431 = vpack.c.b16 %v2423, %v2422
    %2440 = vmatprep.subr.bf16.mxu0 0
    %2441 = vmatpush1.bf16.msra.mxu0 %v2424
    %2442 = vmatprep.subr.bf16.mxu0 0
    %2443 = vmatpush1.bf16.msra.mxu0 %v2425
    %2444 = vmatprep.subr.bf16.mxu0 0
    %2445 = vmatpush1.bf16.msra.mxu0 %v2426
    %2446 = vmatprep.subr.bf16.mxu0 0
    %2447 = vmatpush1.bf16.msra.mxu0 %v2427
    %2448 = vmatprep.subr.bf16.mxu0 0
    %2449 = vmatpush1.bf16.msra.mxu0 %v2428
    %2450 = vmatprep.subr.bf16.mxu0 0
    %2451 = vmatpush1.bf16.msra.mxu0 %v2429
    %2452 = vmatprep.subr.bf16.mxu0 0
    %2453 = vmatpush1.bf16.msra.mxu0 %v2430
    %2454 = vmatprep.subr.bf16.mxu0 0
    %2455 = vmatpush1.bf16.msra.mxu0 %v2431
    %2456 = vmatprep.subr.bf16.mxu0 0
    %2457 = vmatpush1.bf16.msra.mxu0 0
    %2458 = vmatprep.subr.bf16.mxu0 0
    %2459 = vmatpush1.bf16.msra.mxu0 0
    %2460 = vmatprep.subr.bf16.mxu0 0
    %2461 = vmatpush1.bf16.msra.mxu0 0
    %2462 = vmatprep.subr.bf16.mxu0 0
    %2463 = vmatpush1.bf16.msra.mxu0 0
    %2464 = vmatprep.subr.bf16.mxu0 0
    %2465 = vmatpush1.bf16.msra.mxu0 0
    %2466 = vmatprep.subr.bf16.mxu0 0
    %2467 = vmatpush1.bf16.msra.mxu0 0
    %2468 = vmatprep.subr.bf16.mxu0 0
    %2469 = vmatpush1.bf16.msra.mxu0 0
    %2470 = vmatprep.subr.bf16.mxu0 0
    %2471 = vmatpush1.bf16.msra.mxu0 0
    %2472 = vmatprep.mubr.bf16.mxu0 0
    %2473 = vmatmul.mubr.bf16.gmra.mrb[0].mxu0 %v2364
    %v2474 = vpop.f32.mrb[0].mxu0
    %v2475 = vadd.f32 %v2390, %v2474
    %v2476 = vpop.f32.mrb[0].mxu0
    %v2477 = vpop.f32.mrb[0].mxu0
    %v2478 = vadd.f32 %v2390, %v2477
    %v2479 = vpop.f32.mrb[0].mxu0
    %2480 = vmatprep.mubr.bf16.mxu0 0
    %2481 = vmatmul.mubr.bf16.gmra.mrb[0].mxu0 %v2367
    %v2482 = vpop.f32.mrb[0].mxu0
    %v2483 = vadd.f32 %v2390, %v2482
    %v2484 = vpop.f32.mrb[0].mxu0
    %v2485 = vpop.f32.mrb[0].mxu0
    %v2486 = vadd.f32 %v2390, %v2485
    %v2487 = vpop.f32.mrb[0].mxu0
    %2488 = vdwg.mxu0
    %2489 = vst [vmem:[#allocation8] sm:$0xff] %v2475
    %2490 = vst [vmem:[#allocation8 + $0x8] sm:$0xff] %v2478
    %2491 = vst [vmem:[#allocation8 + $0x10] sm:$0xff] %v2483
    %2492 = vst [vmem:[#allocation8 + $0x18] sm:$0xff] %v2486
    // Predicated region
    $region30: #{tpu_custom_call.1} parent=1 // pred_check
      _
    $region31: #{tpu_custom_call.1} parent=1 // pred_check_branch
      %2494 = sbr.rel (0) target = $region33
    $region32: #{tpu_custom_call.1} parent=1 // pred_region
      %s2496 = ssub.s32 512, 512
      %2497 = vsyncadd [#allocation4], %s2496
      %s2498 = sshll.u32 [#allocation8], 4
      %s2499 = int_to_ptr.vmem [resolvable:$true] %s2498
      %2504 = dma.vmem_to_hbm [thread:$0]  %s2499, 512, %s4, [#allocation4], 128, 128, 8
    $region33: #{tpu_custom_call.1} parent=1 // pred_fallthru
      _
    // Predicated region
    $region34: #{tpu_custom_call.1} parent=1 // pred_check
      _
    $region35: #{tpu_custom_call.1} parent=1 // pred_check_branch
      %2506 = sbr.rel (0) target = $region37
    $region36: #{tpu_custom_call.1} parent=1 // pred_region
      %2507 = dma.done [#allocation4], 512
    $region37: #{tpu_custom_call.1} parent=1 // pred_fallthru
      _
    %2508 = vsyncpa [#allocation3], 1
    %2509 = vsyncpa [#allocation6], 1
    %2510 = vsyncpa [#allocation4], 1

</llo_original>
